<compile_context>
chip_gen: v6e
topology: v6e:2x2x1
jax: 0.10.0
libtpu: 0.0.40
codegen_flags: <defaults>
</compile_context>

<pallas_src>
import functools

import jax
import jax.numpy as jnp
import numpy as np
from jax.experimental import pallas as pl
from jax.experimental.pallas import tpu as pltpu


# ----------------------------------------------------------------------------
# Host-side (compile-time constant) per-tap validity masks.
# ----------------------------------------------------------------------------
def _tap_masks(H, W):
    """(9, H*W) 0/1 masks: mask[k, i] == 1 iff tap k's source pixel for flat
    output position i lies inside the (H, W) image.  Tap k is row-major over
    (dy, dx): dy = k//3 - 1, dx = k%3 - 1."""
    HW = H * W
    pos = np.arange(HW)
    col = pos % W
    m = np.ones((9, HW), np.float32)
    for k in range(9):
        dy, dx = k // 3 - 1, k % 3 - 1
        src = pos + dy * W + dx
        valid = (src >= 0) & (src < HW)          # vertical out-of-range
        if dx == -1:
            valid &= col != 0                    # left edge
        elif dx == 1:
            valid &= col != W - 1                # right edge
        m[k] = valid.astype(np.float32)
    return jnp.asarray(m)


# ----------------------------------------------------------------------------
# In-kernel helper: 3x3 conv (stride 1, pad 1) + folded-BN shift + ReLU6,
# accumulate-over-taps (no im2col slab, only one tap live at a time).
# ----------------------------------------------------------------------------
def _conv3x3_bn_relu6(inp, w_ref, b_ref, mask_ref, W):
    """inp: (Cin, H*W) f32, spatial flattened on the lane axis.
    w_ref:    (9, Cout, Cin) bf16 ref, tap-major, BN scale folded in.
    b_ref:    (Cout, 1) f32 ref, folded BN shift.
    mask_ref: (9, H*W) f32 ref, precomputed per-tap validity masks.
    Returns ReLU6(conv + shift), shape (Cout, H*W), f32."""
    HW = inp.shape[1]
    cout = w_ref.shape[1]
    acc = jnp.zeros((cout, HW), jnp.float32)
    for k in range(9):                                  # statically unrolled
        off = (k // 3 - 1) * W + (k % 3 - 1)            # flat-index offset of this tap
        if off == 0:
            tap = inp                                   # center tap: no shift / mask
        else:
            # circular lane rotation on the XLU, then zero out-of-image lanes.
            tap = pltpu.roll(inp, shift=(-off) % HW, axis=1) * mask_ref[k:k + 1, :]
        acc = acc + jnp.dot(w_ref[k], tap.astype(jnp.bfloat16),
                            preferred_element_type=jnp.float32)
    return jnp.clip(acc + b_ref[...], 0.0, 6.0)         # ReLU6


# ----------------------------------------------------------------------------
# Fused CM kernel: cat -> SENet -> CBR1 -> split -> CBR2, one image per step.
# ----------------------------------------------------------------------------
def _cm_kernel(x_ref, z_ref, mask_ref, wfc1t_ref, wfc2_ref, w1_ref, b1_ref,
               w2_ref, b2_ref, xout_ref, zout_ref, *, in_c, W):
    # Concat along channels (sublane axis); in_c / z_c are multiples of 8 so the
    # concat and the later split stay sublane-aligned (no relayout copies).
    xz = jnp.concatenate([x_ref[0], z_ref[0]], axis=0)          # (C, HW) f32

    # ---- SENet on the VPU/XLU: sigmoid( xz * fc2( relu( fc1( gap(xz) ) ) ) ).
    #      The (C,1)-sized fcs are broadcast-multiply + reductions, not N=1 MXU
    #      dots (avoids two serial MXU latencies on the critical path).
    s = jnp.mean(xz, axis=1, keepdims=True)                     # (C, 1) global avg pool
    h = jnp.maximum(jnp.sum(wfc1t_ref[...] * s, axis=0, keepdims=True), 0.0)  # (1, Cmid)
    wse = jnp.sum(wfc2_ref[...] * h, axis=1, keepdims=True)     # (C, 1)
    se = jax.nn.sigmoid(xz * wse)                               # (C, HW)

    # ---- CBR1 on all C channels ---------------------------------------------
    out1 = _conv3x3_bn_relu6(se, w1_ref, b1_ref, mask_ref, W)   # (C, HW) f32

    # ---- split([in_c, z_c]) then CBR2 on the x part --------------------------
    zout_ref[0] = out1[in_c:, :].astype(zout_ref.dtype)         # lane-dense store
    out2 = _conv3x3_bn_relu6(out1[:in_c, :], w2_ref, b2_ref, mask_ref, W)
    xout_ref[0] = out2.astype(xout_ref.dtype)                   # lane-dense store


def cm_forward(x_nchw, z_nchw, params):
    """CM forward.  Inputs are NCHW f32 (PyTorch layout); returns (x, z) NCHW."""
    N, in_c, H, W = x_nchw.shape
    z_c = z_nchw.shape[1]
    C = in_c + z_c
    HW = H * W

    # Free (contiguous) reshapes: NCHW -> channel-major flat layout, no transpose.
    x_flat = x_nchw.reshape(N, in_c, HW).astype(jnp.float32)
    z_flat = z_nchw.reshape(N, z_c, HW).astype(jnp.float32)

    masks = _tap_masks(H, W)                      # compile-time constant (9, HW)
    wfc1_t = params["w_fc1"].T                    # (C, Cmid) layout for the VPU SE
    w1 = params["w1"].astype(jnp.bfloat16)        # bf16 MXU inputs (full-rate)
    w2 = params["w2"].astype(jnp.bfloat16)
    c_mid = wfc1_t.shape[1]

    kern = functools.partial(_cm_kernel, in_c=in_c, W=W)
    x_out, z_out = pl.pallas_call(
        kern,
        out_shape=(jax.ShapeDtypeStruct((N, in_c, HW), jnp.float32),
                   jax.ShapeDtypeStruct((N, z_c, HW), jnp.float32)),
        grid=(N,),
        in_specs=[
            pl.BlockSpec((1, in_c, HW), lambda n: (n, 0, 0)),
            pl.BlockSpec((1, z_c, HW), lambda n: (n, 0, 0)),
            pl.BlockSpec((9, HW), lambda n: (0, 0)),              # tap validity masks
            pl.BlockSpec((C, c_mid), lambda n: (0, 0)),           # SE fc1 (transposed)
            pl.BlockSpec((C, c_mid), lambda n: (0, 0)),           # SE fc2
            pl.BlockSpec((9, C, C), lambda n: (0, 0, 0)),         # CBR1 weight (folded, bf16)
            pl.BlockSpec((C, 1), lambda n: (0, 0)),               # CBR1 shift
            pl.BlockSpec((9, in_c, in_c), lambda n: (0, 0, 0)),   # CBR2 weight (folded, bf16)
            pl.BlockSpec((in_c, 1), lambda n: (0, 0)),            # CBR2 shift
        ],
        out_specs=(pl.BlockSpec((1, in_c, HW), lambda n: (n, 0, 0)),
                   pl.BlockSpec((1, z_c, HW), lambda n: (n, 0, 0))),
        compiler_params=pltpu.CompilerParams(
            dimension_semantics=("parallel",),
            vmem_limit_bytes=32 * 1024 * 1024),
    )(x_flat, z_flat, masks, wfc1_t, params["w_fc2"], w1, params["b1"],
      w2, params["b2"])

    return x_out.reshape(N, in_c, H, W), z_out.reshape(N, z_c, H, W)


# ----------------------------------------------------------------------------
# Parameters (deterministic, synthetic) with BatchNorm folded on the host.
# ----------------------------------------------------------------------------
def _fold_bn(gamma, beta, mean, var, eps=1e-5):
    scale = gamma / jnp.sqrt(var + eps)
    return scale, beta - mean * scale


def _bn_stats(key, c):
    k1, k2, k3, k4 = jax.random.split(key, 4)
    gamma = 1.0 + 0.1 * jax.random.normal(k1, (c,), jnp.float32)
    beta = 0.1 * jax.random.normal(k2, (c,), jnp.float32)
    mean = 0.1 * jax.random.normal(k3, (c,), jnp.float32)
    var = 0.5 + jax.random.uniform(k4, (c,), jnp.float32)
    return gamma, beta, mean, var


def _fold_conv(w_oihw, scale):
    """PyTorch (Cout, Cin, 3, 3) conv weight -> tap-major (9, Cout, Cin) matrix
    with the BN scale folded in; tap index k = kh*3 + kw matches the kernel."""
    cout, cin = w_oihw.shape[0], w_oihw.shape[1]
    w = w_oihw * scale[:, None, None, None]
    return jnp.transpose(w, (2, 3, 0, 1)).reshape(9, cout, cin)


def make_params(key, in_c, z_c):
    C = in_c + z_c
    assert C >= 16, "SENet uses in_planes // 16 hidden channels"
    c_mid = C // 16
    ks = jax.random.split(key, 6)
    w_fc1 = 0.3 * jax.random.normal(ks[0], (c_mid, C), jnp.float32)   # 1x1 conv, no bias
    w_fc2 = 0.3 * jax.random.normal(ks[1], (C, c_mid), jnp.float32)
    w1_pt = 0.1 * jax.random.normal(ks[2], (C, C, 3, 3), jnp.float32)
    s1, b1 = _fold_bn(*_bn_stats(ks[3], C))
    w2_pt = 0.1 * jax.random.normal(ks[4], (in_c, in_c, 3, 3), jnp.float32)
    s2, b2 = _fold_bn(*_bn_stats(ks[5], in_c))
    return dict(w_fc1=w_fc1, w_fc2=w_fc2,
                w1=_fold_conv(w1_pt, s1), b1=b1[:, None],
                w2=_fold_conv(w2_pt, s2), b2=b2[:, None])


# ----------------------------------------------------------------------------
# Pure-JAX reference of the same module (NCHW, full f32), for correctness check.
# ----------------------------------------------------------------------------
def cm_reference(x, z, params, in_c, z_c):
    hp = jax.lax.Precision.HIGHEST
    xz = jnp.concatenate([x, z], axis=1)                          # (N, C, H, W)
    s = jnp.mean(xz, axis=(2, 3))                                 # (N, C)
    h = jnp.maximum(jnp.dot(s, params["w_fc1"].T, precision=hp), 0.0)
    wse = jnp.dot(h, params["w_fc2"].T, precision=hp)             # (N, C)
    se = jax.nn.sigmoid(xz * wse[:, :, None, None])

    def cbr(inp, w9, b):
        cout, cin = w9.shape[1], w9.shape[2]
        w = w9.reshape(3, 3, cout, cin).transpose(2, 3, 0, 1)     # OIHW, scale folded
        y = jax.lax.conv_general_dilated(
            inp, w, window_strides=(1, 1), padding=((1, 1), (1, 1)),
            dimension_numbers=("NCHW", "OIHW", "NCHW"), precision=hp)
        return jnp.clip(y + b.reshape(1, cout, 1, 1), 0.0, 6.0)

    out1 = cbr(se, params["w1"], params["b1"])
    xo = cbr(out1[:, :in_c], params["w2"], params["b2"])
    return xo, out1[:, in_c:]


if __name__ == "__main__":
    key = jax.random.PRNGKey(0)
    kx, kz, kp = jax.random.split(key, 3)

    N, in_c, z_c, H, W = 2, 16, 16, 16, 16       # in_c + z_c >= 16 for SENet's fc1
    x = jax.random.normal(kx, (N, in_c, H, W), jnp.float32)   # NCHW, like PyTorch
    z = jax.random.normal(kz, (N, z_c, H, W), jnp.float32)
    params = make_params(kp, in_c, z_c)

    x_out, z_out = jax.jit(cm_forward)(x, z, params)
    x_out.block_until_ready()
    z_out.block_until_ready()

    assert x_out.shape == (N, in_c, H, W), x_out.shape
    assert z_out.shape == (N, z_c, H, W), z_out.shape
    assert bool(jnp.isfinite(x_out).all()) and bool(jnp.isfinite(z_out).all())

    # Check against a pure-JAX/XLA reference of the same module.  The kernel
    # uses bf16 conv weights/taps on the MXU (f32 accumulation), so the max-abs
    # tolerance vs. the HIGHEST-precision f32 reference is relaxed accordingly.
    x_ref, z_ref = cm_reference(x, z, params, in_c, z_c)
    err_x = float(jnp.max(jnp.abs(x_out - x_ref)))
    err_z = float(jnp.max(jnp.abs(z_out - z_ref)))
    assert err_x < 5e-2 and err_z < 5e-2, (err_x, err_z)

    print("KERNEL_OK")
</pallas_src>

<mosaic_0001>
module attributes {stable_mosaic.version = 11 : i64} {
  func.func @_cm_kernel(%arg0: i32, %arg1: memref<1x16x256xf32, #tpu.memory_space<vmem>>, %arg2: memref<1x16x256xf32, #tpu.memory_space<vmem>>, %arg3: memref<9x256xf32, #tpu.memory_space<vmem>>, %arg4: memref<32x2xf32, #tpu.memory_space<vmem>>, %arg5: memref<32x2xf32, #tpu.memory_space<vmem>>, %arg6: memref<9x32x32xbf16, #tpu.memory_space<vmem>>, %arg7: memref<32x1xf32, #tpu.memory_space<vmem>>, %arg8: memref<9x16x16xbf16, #tpu.memory_space<vmem>>, %arg9: memref<16x1xf32, #tpu.memory_space<vmem>>, %arg10: memref<1x16x256xf32, #tpu.memory_space<vmem>>, %arg11: memref<1x16x256xf32, #tpu.memory_space<vmem>>) attributes {dimension_semantics = [#tpu.dimension_semantics<parallel>], iteration_bounds = array<i64: 2>, scalar_prefetch = 0 : i64, scratch_operands = 0 : i64, tpu.core_type = #tpu.core_type<tc>, window_params = [{transform_indices = @transform_0, window_bounds = array<i64: 1, 16, 256>}, {transform_indices = @transform_1, window_bounds = array<i64: 1, 16, 256>}, {pipeline_mode = #tpu.pipeline_mode<synchronous>, transform_indices = @transform_2, window_bounds = array<i64: 9, 256>}, {pipeline_mode = #tpu.pipeline_mode<synchronous>, transform_indices = @transform_3, window_bounds = array<i64: 32, 2>}, {pipeline_mode = #tpu.pipeline_mode<synchronous>, transform_indices = @transform_4, window_bounds = array<i64: 32, 2>}, {pipeline_mode = #tpu.pipeline_mode<synchronous>, transform_indices = @transform_5, window_bounds = array<i64: 9, 32, 32>}, {pipeline_mode = #tpu.pipeline_mode<synchronous>, transform_indices = @transform_6, window_bounds = array<i64: 32, 1>}, {pipeline_mode = #tpu.pipeline_mode<synchronous>, transform_indices = @transform_7, window_bounds = array<i64: 9, 16, 16>}, {pipeline_mode = #tpu.pipeline_mode<synchronous>, transform_indices = @transform_8, window_bounds = array<i64: 16, 1>}, {transform_indices = @transform_9, window_bounds = array<i64: 1, 16, 256>}, {transform_indices = @transform_10, window_bounds = array<i64: 1, 16, 256>}]} {
    %c0 = arith.constant 0 : index
    %c0_0 = arith.constant 0 : index
    %c0_1 = arith.constant 0 : index
    %0 = vector.load %arg1[%c0, %c0_0, %c0_1] : memref<1x16x256xf32, #tpu.memory_space<vmem>>, vector<1x16x256xf32>
    %1 = vector.shape_cast %0 : vector<1x16x256xf32> to vector<16x256xf32>
    %c0_2 = arith.constant 0 : index
    %c0_3 = arith.constant 0 : index
    %c0_4 = arith.constant 0 : index
    %2 = vector.load %arg2[%c0_2, %c0_3, %c0_4] : memref<1x16x256xf32, #tpu.memory_space<vmem>>, vector<1x16x256xf32>
    %3 = vector.shape_cast %2 : vector<1x16x256xf32> to vector<16x256xf32>
    %4 = tpu.concatenate %1, %3 in 0 : vector<16x256xf32>, vector<16x256xf32> -> vector<32x256xf32>
    %cst = arith.constant dense<0.000000e+00> : vector<32xf32>
    %5 = vector.multi_reduction <add>, %4, %cst [1] : vector<32x256xf32> to vector<32xf32>
    %6 = vector.shape_cast %5 : vector<32xf32> to vector<32x1xf32>
    %cst_5 = arith.constant 2.560000e+02 : f32
    %7 = vector.broadcast %cst_5 : f32 to vector<32x1xf32>
    %8 = arith.divf %6, %7 : vector<32x1xf32>
    %c0_6 = arith.constant 0 : index
    %c0_7 = arith.constant 0 : index
    %9 = vector.load %arg4[%c0_6, %c0_7] : memref<32x2xf32, #tpu.memory_space<vmem>>, vector<32x2xf32>
    %10 = vector.broadcast %8 : vector<32x1xf32> to vector<32x2xf32>
    %11 = arith.mulf %9, %10 : vector<32x2xf32>
    %cst_8 = arith.constant dense<0.000000e+00> : vector<2xf32>
    %12 = vector.multi_reduction <add>, %11, %cst_8 [0] : vector<32x2xf32> to vector<2xf32>
    %13 = vector.shape_cast %12 : vector<2xf32> to vector<1x2xf32>
    %cst_9 = arith.constant 0.000000e+00 : f32
    %14 = vector.broadcast %cst_9 : f32 to vector<1x2xf32>
    %15 = arith.maximumf %13, %14 : vector<1x2xf32>
    %c0_10 = arith.constant 0 : index
    %c0_11 = arith.constant 0 : index
    %16 = vector.load %arg5[%c0_10, %c0_11] : memref<32x2xf32, #tpu.memory_space<vmem>>, vector<32x2xf32>
    %17 = vector.broadcast %15 : vector<1x2xf32> to vector<32x2xf32>
    %18 = arith.mulf %16, %17 : vector<32x2xf32>
    %cst_12 = arith.constant dense<0.000000e+00> : vector<32xf32>
    %19 = vector.multi_reduction <add>, %18, %cst_12 [1] : vector<32x2xf32> to vector<32xf32>
    %20 = vector.shape_cast %19 : vector<32xf32> to vector<32x1xf32>
    %21 = vector.broadcast %20 : vector<32x1xf32> to vector<32x256xf32>
    %22 = arith.mulf %4, %21 : vector<32x256xf32>
    %23 = arith.negf %22 : vector<32x256xf32>
    %24 = math.exp %23 : vector<32x256xf32>
    %cst_13 = arith.constant 1.000000e+00 : f32
    %25 = vector.broadcast %cst_13 : f32 to vector<32x256xf32>
    %26 = arith.addf %25, %24 : vector<32x256xf32>
    %27 = arith.divf %25, %26 : vector<32x256xf32>
    %cst_14 = arith.constant 0.000000e+00 : f32
    %28 = vector.broadcast %cst_14 : f32 to vector<32x256xf32>
    %c17_i32 = arith.constant 17 : i32
    %29 = tpu.dynamic_rotate %27 by %c17_i32 dim 1 : vector<32x256xf32>, i32 -> vector<32x256xf32>
    %c0_15 = arith.constant 0 : index
    %c0_16 = arith.constant 0 : index
    %30 = vector.load %arg3[%c0_15, %c0_16] : memref<9x256xf32, #tpu.memory_space<vmem>>, vector<1x256xf32>
    %31 = vector.broadcast %30 : vector<1x256xf32> to vector<32x256xf32>
    %32 = arith.mulf %29, %31 : vector<32x256xf32>
    %c0_17 = arith.constant 0 : index
    %c0_18 = arith.constant 0 : index
    %c0_19 = arith.constant 0 : index
    %33 = vector.load %arg6[%c0_17, %c0_18, %c0_19] : memref<9x32x32xbf16, #tpu.memory_space<vmem>>, vector<1x32x32xbf16>
    %34 = vector.shape_cast %33 : vector<1x32x32xbf16> to vector<32x32xbf16>
    %35 = arith.truncf %32 : vector<32x256xf32> to vector<32x256xbf16>
    %cst_20 = arith.constant dense<0.000000e+00> : vector<32x256xf32>
    %36 = tpu.matmul %34, %35, %cst_20 {dimension_numbers = #tpu.dot_dimension_numbers<[1], [0], [0], [1], [0, 0, 1, 1], [], []>} : vector<32x32xbf16>, vector<32x256xbf16>, vector<32x256xf32> -> vector<32x256xf32>
    %37 = arith.addf %28, %36 : vector<32x256xf32>
    %c16_i32 = arith.constant 16 : i32
    %38 = tpu.dynamic_rotate %27 by %c16_i32 dim 1 : vector<32x256xf32>, i32 -> vector<32x256xf32>
    %c1 = arith.constant 1 : index
    %c0_21 = arith.constant 0 : index
    %39 = vector.load %arg3[%c1, %c0_21] : memref<9x256xf32, #tpu.memory_space<vmem>>, vector<1x256xf32>
    %40 = vector.broadcast %39 : vector<1x256xf32> to vector<32x256xf32>
    %41 = arith.mulf %38, %40 : vector<32x256xf32>
    %c1_22 = arith.constant 1 : index
    %c0_23 = arith.constant 0 : index
    %c0_24 = arith.constant 0 : index
    %42 = vector.load %arg6[%c1_22, %c0_23, %c0_24] : memref<9x32x32xbf16, #tpu.memory_space<vmem>>, vector<1x32x32xbf16>
    %43 = vector.shape_cast %42 : vector<1x32x32xbf16> to vector<32x32xbf16>
    %44 = arith.truncf %41 : vector<32x256xf32> to vector<32x256xbf16>
    %cst_25 = arith.constant dense<0.000000e+00> : vector<32x256xf32>
    %45 = tpu.matmul %43, %44, %cst_25 {dimension_numbers = #tpu.dot_dimension_numbers<[1], [0], [0], [1], [0, 0, 1, 1], [], []>} : vector<32x32xbf16>, vector<32x256xbf16>, vector<32x256xf32> -> vector<32x256xf32>
    %46 = arith.addf %37, %45 : vector<32x256xf32>
    %c15_i32 = arith.constant 15 : i32
    %47 = tpu.dynamic_rotate %27 by %c15_i32 dim 1 : vector<32x256xf32>, i32 -> vector<32x256xf32>
    %c2 = arith.constant 2 : index
    %c0_26 = arith.constant 0 : index
    %48 = vector.load %arg3[%c2, %c0_26] : memref<9x256xf32, #tpu.memory_space<vmem>>, vector<1x256xf32>
    %49 = vector.broadcast %48 : vector<1x256xf32> to vector<32x256xf32>
    %50 = arith.mulf %47, %49 : vector<32x256xf32>
    %c2_27 = arith.constant 2 : index
    %c0_28 = arith.constant 0 : index
    %c0_29 = arith.constant 0 : index
    %51 = vector.load %arg6[%c2_27, %c0_28, %c0_29] : memref<9x32x32xbf16, #tpu.memory_space<vmem>>, vector<1x32x32xbf16>
    %52 = vector.shape_cast %51 : vector<1x32x32xbf16> to vector<32x32xbf16>
    %53 = arith.truncf %50 : vector<32x256xf32> to vector<32x256xbf16>
    %cst_30 = arith.constant dense<0.000000e+00> : vector<32x256xf32>
    %54 = tpu.matmul %52, %53, %cst_30 {dimension_numbers = #tpu.dot_dimension_numbers<[1], [0], [0], [1], [0, 0, 1, 1], [], []>} : vector<32x32xbf16>, vector<32x256xbf16>, vector<32x256xf32> -> vector<32x256xf32>
    %55 = arith.addf %46, %54 : vector<32x256xf32>
    %c1_i32 = arith.constant 1 : i32
    %56 = tpu.dynamic_rotate %27 by %c1_i32 dim 1 : vector<32x256xf32>, i32 -> vector<32x256xf32>
    %c3 = arith.constant 3 : index
    %c0_31 = arith.constant 0 : index
    %57 = vector.load %arg3[%c3, %c0_31] : memref<9x256xf32, #tpu.memory_space<vmem>>, vector<1x256xf32>
    %58 = vector.broadcast %57 : vector<1x256xf32> to vector<32x256xf32>
    %59 = arith.mulf %56, %58 : vector<32x256xf32>
    %c3_32 = arith.constant 3 : index
    %c0_33 = arith.constant 0 : index
    %c0_34 = arith.constant 0 : index
    %60 = vector.load %arg6[%c3_32, %c0_33, %c0_34] : memref<9x32x32xbf16, #tpu.memory_space<vmem>>, vector<1x32x32xbf16>
    %61 = vector.shape_cast %60 : vector<1x32x32xbf16> to vector<32x32xbf16>
    %62 = arith.truncf %59 : vector<32x256xf32> to vector<32x256xbf16>
    %cst_35 = arith.constant dense<0.000000e+00> : vector<32x256xf32>
    %63 = tpu.matmul %61, %62, %cst_35 {dimension_numbers = #tpu.dot_dimension_numbers<[1], [0], [0], [1], [0, 0, 1, 1], [], []>} : vector<32x32xbf16>, vector<32x256xbf16>, vector<32x256xf32> -> vector<32x256xf32>
    %64 = arith.addf %55, %63 : vector<32x256xf32>
    %c4 = arith.constant 4 : index
    %c0_36 = arith.constant 0 : index
    %c0_37 = arith.constant 0 : index
    %65 = vector.load %arg6[%c4, %c0_36, %c0_37] : memref<9x32x32xbf16, #tpu.memory_space<vmem>>, vector<1x32x32xbf16>
    %66 = vector.shape_cast %65 : vector<1x32x32xbf16> to vector<32x32xbf16>
    %67 = arith.truncf %27 : vector<32x256xf32> to vector<32x256xbf16>
    %cst_38 = arith.constant dense<0.000000e+00> : vector<32x256xf32>
    %68 = tpu.matmul %66, %67, %cst_38 {dimension_numbers = #tpu.dot_dimension_numbers<[1], [0], [0], [1], [0, 0, 1, 1], [], []>} : vector<32x32xbf16>, vector<32x256xbf16>, vector<32x256xf32> -> vector<32x256xf32>
    %69 = arith.addf %64, %68 : vector<32x256xf32>
    %c255_i32 = arith.constant 255 : i32
    %70 = tpu.dynamic_rotate %27 by %c255_i32 dim 1 : vector<32x256xf32>, i32 -> vector<32x256xf32>
    %c5 = arith.constant 5 : index
    %c0_39 = arith.constant 0 : index
    %71 = vector.load %arg3[%c5, %c0_39] : memref<9x256xf32, #tpu.memory_space<vmem>>, vector<1x256xf32>
    %72 = vector.broadcast %71 : vector<1x256xf32> to vector<32x256xf32>
    %73 = arith.mulf %70, %72 : vector<32x256xf32>
    %c5_40 = arith.constant 5 : index
    %c0_41 = arith.constant 0 : index
    %c0_42 = arith.constant 0 : index
    %74 = vector.load %arg6[%c5_40, %c0_41, %c0_42] : memref<9x32x32xbf16, #tpu.memory_space<vmem>>, vector<1x32x32xbf16>
    %75 = vector.shape_cast %74 : vector<1x32x32xbf16> to vector<32x32xbf16>
    %76 = arith.truncf %73 : vector<32x256xf32> to vector<32x256xbf16>
    %cst_43 = arith.constant dense<0.000000e+00> : vector<32x256xf32>
    %77 = tpu.matmul %75, %76, %cst_43 {dimension_numbers = #tpu.dot_dimension_numbers<[1], [0], [0], [1], [0, 0, 1, 1], [], []>} : vector<32x32xbf16>, vector<32x256xbf16>, vector<32x256xf32> -> vector<32x256xf32>
    %78 = arith.addf %69, %77 : vector<32x256xf32>
    %c241_i32 = arith.constant 241 : i32
    %79 = tpu.dynamic_rotate %27 by %c241_i32 dim 1 : vector<32x256xf32>, i32 -> vector<32x256xf32>
    %c6 = arith.constant 6 : index
    %c0_44 = arith.constant 0 : index
    %80 = vector.load %arg3[%c6, %c0_44] : memref<9x256xf32, #tpu.memory_space<vmem>>, vector<1x256xf32>
    %81 = vector.broadcast %80 : vector<1x256xf32> to vector<32x256xf32>
    %82 = arith.mulf %79, %81 : vector<32x256xf32>
    %c6_45 = arith.constant 6 : index
    %c0_46 = arith.constant 0 : index
    %c0_47 = arith.constant 0 : index
    %83 = vector.load %arg6[%c6_45, %c0_46, %c0_47] : memref<9x32x32xbf16, #tpu.memory_space<vmem>>, vector<1x32x32xbf16>
    %84 = vector.shape_cast %83 : vector<1x32x32xbf16> to vector<32x32xbf16>
    %85 = arith.truncf %82 : vector<32x256xf32> to vector<32x256xbf16>
    %cst_48 = arith.constant dense<0.000000e+00> : vector<32x256xf32>
    %86 = tpu.matmul %84, %85, %cst_48 {dimension_numbers = #tpu.dot_dimension_numbers<[1], [0], [0], [1], [0, 0, 1, 1], [], []>} : vector<32x32xbf16>, vector<32x256xbf16>, vector<32x256xf32> -> vector<32x256xf32>
    %87 = arith.addf %78, %86 : vector<32x256xf32>
    %c240_i32 = arith.constant 240 : i32
    %88 = tpu.dynamic_rotate %27 by %c240_i32 dim 1 : vector<32x256xf32>, i32 -> vector<32x256xf32>
    %c7 = arith.constant 7 : index
    %c0_49 = arith.constant 0 : index
    %89 = vector.load %arg3[%c7, %c0_49] : memref<9x256xf32, #tpu.memory_space<vmem>>, vector<1x256xf32>
    %90 = vector.broadcast %89 : vector<1x256xf32> to vector<32x256xf32>
    %91 = arith.mulf %88, %90 : vector<32x256xf32>
    %c7_50 = arith.constant 7 : index
    %c0_51 = arith.constant 0 : index
    %c0_52 = arith.constant 0 : index
    %92 = vector.load %arg6[%c7_50, %c0_51, %c0_52] : memref<9x32x32xbf16, #tpu.memory_space<vmem>>, vector<1x32x32xbf16>
    %93 = vector.shape_cast %92 : vector<1x32x32xbf16> to vector<32x32xbf16>
    %94 = arith.truncf %91 : vector<32x256xf32> to vector<32x256xbf16>
    %cst_53 = arith.constant dense<0.000000e+00> : vector<32x256xf32>
    %95 = tpu.matmul %93, %94, %cst_53 {dimension_numbers = #tpu.dot_dimension_numbers<[1], [0], [0], [1], [0, 0, 1, 1], [], []>} : vector<32x32xbf16>, vector<32x256xbf16>, vector<32x256xf32> -> vector<32x256xf32>
    %96 = arith.addf %87, %95 : vector<32x256xf32>
    %c239_i32 = arith.constant 239 : i32
    %97 = tpu.dynamic_rotate %27 by %c239_i32 dim 1 : vector<32x256xf32>, i32 -> vector<32x256xf32>
    %c8 = arith.constant 8 : index
    %c0_54 = arith.constant 0 : index
    %98 = vector.load %arg3[%c8, %c0_54] : memref<9x256xf32, #tpu.memory_space<vmem>>, vector<1x256xf32>
    %99 = vector.broadcast %98 : vector<1x256xf32> to vector<32x256xf32>
    %100 = arith.mulf %97, %99 : vector<32x256xf32>
    %c8_55 = arith.constant 8 : index
    %c0_56 = arith.constant 0 : index
    %c0_57 = arith.constant 0 : index
    %101 = vector.load %arg6[%c8_55, %c0_56, %c0_57] : memref<9x32x32xbf16, #tpu.memory_space<vmem>>, vector<1x32x32xbf16>
    %102 = vector.shape_cast %101 : vector<1x32x32xbf16> to vector<32x32xbf16>
    %103 = arith.truncf %100 : vector<32x256xf32> to vector<32x256xbf16>
    %cst_58 = arith.constant dense<0.000000e+00> : vector<32x256xf32>
    %104 = tpu.matmul %102, %103, %cst_58 {dimension_numbers = #tpu.dot_dimension_numbers<[1], [0], [0], [1], [0, 0, 1, 1], [], []>} : vector<32x32xbf16>, vector<32x256xbf16>, vector<32x256xf32> -> vector<32x256xf32>
    %105 = arith.addf %96, %104 : vector<32x256xf32>
    %c0_59 = arith.constant 0 : index
    %c0_60 = arith.constant 0 : index
    %106 = vector.load %arg7[%c0_59, %c0_60] : memref<32x1xf32, #tpu.memory_space<vmem>>, vector<32x1xf32>
    %107 = vector.broadcast %106 : vector<32x1xf32> to vector<32x256xf32>
    %108 = arith.addf %105, %107 : vector<32x256xf32>
    %cst_61 = arith.constant 0.000000e+00 : f32
    %cst_62 = arith.constant 6.000000e+00 : f32
    %109 = vector.broadcast %cst_61 : f32 to vector<32x256xf32>
    %110 = arith.maximumf %109, %108 : vector<32x256xf32>
    %111 = vector.broadcast %cst_62 : f32 to vector<32x256xf32>
    %112 = arith.minimumf %111, %110 : vector<32x256xf32>
    %113 = vector.extract_strided_slice %112 {offsets = [16, 0], sizes = [16, 256], strides = [1, 1]} : vector<32x256xf32> to vector<16x256xf32>
    %c0_63 = arith.constant 0 : index
    %c0_64 = arith.constant 0 : index
    %c0_65 = arith.constant 0 : index
    %114 = vector.load %arg11[%c0_63, %c0_64, %c0_65] : memref<1x16x256xf32, #tpu.memory_space<vmem>>, vector<1x16x256xf32>
    %115 = vector.shape_cast %114 : vector<1x16x256xf32> to vector<16x256xf32>
    %116 = vector.shape_cast %113 : vector<16x256xf32> to vector<1x16x256xf32>
    tpu.vector_store %arg11[%c0_63, %c0_64, %c0_65], %116 {strides = array<i32>} : memref<1x16x256xf32, #tpu.memory_space<vmem>>, vector<1x16x256xf32>,
    %117 = vector.extract_strided_slice %112 {offsets = [0, 0], sizes = [16, 256], strides = [1, 1]} : vector<32x256xf32> to vector<16x256xf32>
    %cst_66 = arith.constant 0.000000e+00 : f32
    %118 = vector.broadcast %cst_66 : f32 to vector<16x256xf32>
    %c17_i32_67 = arith.constant 17 : i32
    %119 = tpu.dynamic_rotate %117 by %c17_i32_67 dim 1 : vector<16x256xf32>, i32 -> vector<16x256xf32>
    %c0_68 = arith.constant 0 : index
    %c0_69 = arith.constant 0 : index
    %120 = vector.load %arg3[%c0_68, %c0_69] : memref<9x256xf32, #tpu.memory_space<vmem>>, vector<1x256xf32>
    %121 = vector.broadcast %120 : vector<1x256xf32> to vector<16x256xf32>
    %122 = arith.mulf %119, %121 : vector<16x256xf32>
    %c0_70 = arith.constant 0 : index
    %c0_71 = arith.constant 0 : index
    %c0_72 = arith.constant 0 : index
    %123 = vector.load %arg8[%c0_70, %c0_71, %c0_72] : memref<9x16x16xbf16, #tpu.memory_space<vmem>>, vector<1x16x16xbf16>
    %124 = vector.shape_cast %123 : vector<1x16x16xbf16> to vector<16x16xbf16>
    %125 = arith.truncf %122 : vector<16x256xf32> to vector<16x256xbf16>
    %cst_73 = arith.constant dense<0.000000e+00> : vector<16x256xf32>
    %126 = tpu.matmul %124, %125, %cst_73 {dimension_numbers = #tpu.dot_dimension_numbers<[1], [0], [0], [1], [0, 0, 1, 1], [], []>} : vector<16x16xbf16>, vector<16x256xbf16>, vector<16x256xf32> -> vector<16x256xf32>
    %127 = arith.addf %118, %126 : vector<16x256xf32>
    %c16_i32_74 = arith.constant 16 : i32
    %128 = tpu.dynamic_rotate %117 by %c16_i32_74 dim 1 : vector<16x256xf32>, i32 -> vector<16x256xf32>
    %c1_75 = arith.constant 1 : index
    %c0_76 = arith.constant 0 : index
    %129 = vector.load %arg3[%c1_75, %c0_76] : memref<9x256xf32, #tpu.memory_space<vmem>>, vector<1x256xf32>
    %130 = vector.broadcast %129 : vector<1x256xf32> to vector<16x256xf32>
    %131 = arith.mulf %128, %130 : vector<16x256xf32>
    %c1_77 = arith.constant 1 : index
    %c0_78 = arith.constant 0 : index
    %c0_79 = arith.constant 0 : index
    %132 = vector.load %arg8[%c1_77, %c0_78, %c0_79] : memref<9x16x16xbf16, #tpu.memory_space<vmem>>, vector<1x16x16xbf16>
    %133 = vector.shape_cast %132 : vector<1x16x16xbf16> to vector<16x16xbf16>
    %134 = arith.truncf %131 : vector<16x256xf32> to vector<16x256xbf16>
    %cst_80 = arith.constant dense<0.000000e+00> : vector<16x256xf32>
    %135 = tpu.matmul %133, %134, %cst_80 {dimension_numbers = #tpu.dot_dimension_numbers<[1], [0], [0], [1], [0, 0, 1, 1], [], []>} : vector<16x16xbf16>, vector<16x256xbf16>, vector<16x256xf32> -> vector<16x256xf32>
    %136 = arith.addf %127, %135 : vector<16x256xf32>
    %c15_i32_81 = arith.constant 15 : i32
    %137 = tpu.dynamic_rotate %117 by %c15_i32_81 dim 1 : vector<16x256xf32>, i32 -> vector<16x256xf32>
    %c2_82 = arith.constant 2 : index
    %c0_83 = arith.constant 0 : index
    %138 = vector.load %arg3[%c2_82, %c0_83] : memref<9x256xf32, #tpu.memory_space<vmem>>, vector<1x256xf32>
    %139 = vector.broadcast %138 : vector<1x256xf32> to vector<16x256xf32>
    %140 = arith.mulf %137, %139 : vector<16x256xf32>
    %c2_84 = arith.constant 2 : index
    %c0_85 = arith.constant 0 : index
    %c0_86 = arith.constant 0 : index
    %141 = vector.load %arg8[%c2_84, %c0_85, %c0_86] : memref<9x16x16xbf16, #tpu.memory_space<vmem>>, vector<1x16x16xbf16>
    %142 = vector.shape_cast %141 : vector<1x16x16xbf16> to vector<16x16xbf16>
    %143 = arith.truncf %140 : vector<16x256xf32> to vector<16x256xbf16>
    %cst_87 = arith.constant dense<0.000000e+00> : vector<16x256xf32>
    %144 = tpu.matmul %142, %143, %cst_87 {dimension_numbers = #tpu.dot_dimension_numbers<[1], [0], [0], [1], [0, 0, 1, 1], [], []>} : vector<16x16xbf16>, vector<16x256xbf16>, vector<16x256xf32> -> vector<16x256xf32>
    %145 = arith.addf %136, %144 : vector<16x256xf32>
    %c1_i32_88 = arith.constant 1 : i32
    %146 = tpu.dynamic_rotate %117 by %c1_i32_88 dim 1 : vector<16x256xf32>, i32 -> vector<16x256xf32>
    %c3_89 = arith.constant 3 : index
    %c0_90 = arith.constant 0 : index
    %147 = vector.load %arg3[%c3_89, %c0_90] : memref<9x256xf32, #tpu.memory_space<vmem>>, vector<1x256xf32>
    %148 = vector.broadcast %147 : vector<1x256xf32> to vector<16x256xf32>
    %149 = arith.mulf %146, %148 : vector<16x256xf32>
    %c3_91 = arith.constant 3 : index
    %c0_92 = arith.constant 0 : index
    %c0_93 = arith.constant 0 : index
    %150 = vector.load %arg8[%c3_91, %c0_92, %c0_93] : memref<9x16x16xbf16, #tpu.memory_space<vmem>>, vector<1x16x16xbf16>
    %151 = vector.shape_cast %150 : vector<1x16x16xbf16> to vector<16x16xbf16>
    %152 = arith.truncf %149 : vector<16x256xf32> to vector<16x256xbf16>
    %cst_94 = arith.constant dense<0.000000e+00> : vector<16x256xf32>
    %153 = tpu.matmul %151, %152, %cst_94 {dimension_numbers = #tpu.dot_dimension_numbers<[1], [0], [0], [1], [0, 0, 1, 1], [], []>} : vector<16x16xbf16>, vector<16x256xbf16>, vector<16x256xf32> -> vector<16x256xf32>
    %154 = arith.addf %145, %153 : vector<16x256xf32>
    %c4_95 = arith.constant 4 : index
    %c0_96 = arith.constant 0 : index
    %c0_97 = arith.constant 0 : index
    %155 = vector.load %arg8[%c4_95, %c0_96, %c0_97] : memref<9x16x16xbf16, #tpu.memory_space<vmem>>, vector<1x16x16xbf16>
    %156 = vector.shape_cast %155 : vector<1x16x16xbf16> to vector<16x16xbf16>
    %157 = arith.truncf %117 : vector<16x256xf32> to vector<16x256xbf16>
    %cst_98 = arith.constant dense<0.000000e+00> : vector<16x256xf32>
    %158 = tpu.matmul %156, %157, %cst_98 {dimension_numbers = #tpu.dot_dimension_numbers<[1], [0], [0], [1], [0, 0, 1, 1], [], []>} : vector<16x16xbf16>, vector<16x256xbf16>, vector<16x256xf32> -> vector<16x256xf32>
    %159 = arith.addf %154, %158 : vector<16x256xf32>
    %c255_i32_99 = arith.constant 255 : i32
    %160 = tpu.dynamic_rotate %117 by %c255_i32_99 dim 1 : vector<16x256xf32>, i32 -> vector<16x256xf32>
    %c5_100 = arith.constant 5 : index
    %c0_101 = arith.constant 0 : index
    %161 = vector.load %arg3[%c5_100, %c0_101] : memref<9x256xf32, #tpu.memory_space<vmem>>, vector<1x256xf32>
    %162 = vector.broadcast %161 : vector<1x256xf32> to vector<16x256xf32>
    %163 = arith.mulf %160, %162 : vector<16x256xf32>
    %c5_102 = arith.constant 5 : index
    %c0_103 = arith.constant 0 : index
    %c0_104 = arith.constant 0 : index
    %164 = vector.load %arg8[%c5_102, %c0_103, %c0_104] : memref<9x16x16xbf16, #tpu.memory_space<vmem>>, vector<1x16x16xbf16>
    %165 = vector.shape_cast %164 : vector<1x16x16xbf16> to vector<16x16xbf16>
    %166 = arith.truncf %163 : vector<16x256xf32> to vector<16x256xbf16>
    %cst_105 = arith.constant dense<0.000000e+00> : vector<16x256xf32>
    %167 = tpu.matmul %165, %166, %cst_105 {dimension_numbers = #tpu.dot_dimension_numbers<[1], [0], [0], [1], [0, 0, 1, 1], [], []>} : vector<16x16xbf16>, vector<16x256xbf16>, vector<16x256xf32> -> vector<16x256xf32>
    %168 = arith.addf %159, %167 : vector<16x256xf32>
    %c241_i32_106 = arith.constant 241 : i32
    %169 = tpu.dynamic_rotate %117 by %c241_i32_106 dim 1 : vector<16x256xf32>, i32 -> vector<16x256xf32>
    %c6_107 = arith.constant 6 : index
    %c0_108 = arith.constant 0 : index
    %170 = vector.load %arg3[%c6_107, %c0_108] : memref<9x256xf32, #tpu.memory_space<vmem>>, vector<1x256xf32>
    %171 = vector.broadcast %170 : vector<1x256xf32> to vector<16x256xf32>
    %172 = arith.mulf %169, %171 : vector<16x256xf32>
    %c6_109 = arith.constant 6 : index
    %c0_110 = arith.constant 0 : index
    %c0_111 = arith.constant 0 : index
    %173 = vector.load %arg8[%c6_109, %c0_110, %c0_111] : memref<9x16x16xbf16, #tpu.memory_space<vmem>>, vector<1x16x16xbf16>
    %174 = vector.shape_cast %173 : vector<1x16x16xbf16> to vector<16x16xbf16>
    %175 = arith.truncf %172 : vector<16x256xf32> to vector<16x256xbf16>
    %cst_112 = arith.constant dense<0.000000e+00> : vector<16x256xf32>
    %176 = tpu.matmul %174, %175, %cst_112 {dimension_numbers = #tpu.dot_dimension_numbers<[1], [0], [0], [1], [0, 0, 1, 1], [], []>} : vector<16x16xbf16>, vector<16x256xbf16>, vector<16x256xf32> -> vector<16x256xf32>
    %177 = arith.addf %168, %176 : vector<16x256xf32>
    %c240_i32_113 = arith.constant 240 : i32
    %178 = tpu.dynamic_rotate %117 by %c240_i32_113 dim 1 : vector<16x256xf32>, i32 -> vector<16x256xf32>
    %c7_114 = arith.constant 7 : index
    %c0_115 = arith.constant 0 : index
    %179 = vector.load %arg3[%c7_114, %c0_115] : memref<9x256xf32, #tpu.memory_space<vmem>>, vector<1x256xf32>
    %180 = vector.broadcast %179 : vector<1x256xf32> to vector<16x256xf32>
    %181 = arith.mulf %178, %180 : vector<16x256xf32>
    %c7_116 = arith.constant 7 : index
    %c0_117 = arith.constant 0 : index
    %c0_118 = arith.constant 0 : index
    %182 = vector.load %arg8[%c7_116, %c0_117, %c0_118] : memref<9x16x16xbf16, #tpu.memory_space<vmem>>, vector<1x16x16xbf16>
    %183 = vector.shape_cast %182 : vector<1x16x16xbf16> to vector<16x16xbf16>
    %184 = arith.truncf %181 : vector<16x256xf32> to vector<16x256xbf16>
    %cst_119 = arith.constant dense<0.000000e+00> : vector<16x256xf32>
    %185 = tpu.matmul %183, %184, %cst_119 {dimension_numbers = #tpu.dot_dimension_numbers<[1], [0], [0], [1], [0, 0, 1, 1], [], []>} : vector<16x16xbf16>, vector<16x256xbf16>, vector<16x256xf32> -> vector<16x256xf32>
    %186 = arith.addf %177, %185 : vector<16x256xf32>
    %c239_i32_120 = arith.constant 239 : i32
    %187 = tpu.dynamic_rotate %117 by %c239_i32_120 dim 1 : vector<16x256xf32>, i32 -> vector<16x256xf32>
    %c8_121 = arith.constant 8 : index
    %c0_122 = arith.constant 0 : index
    %188 = vector.load %arg3[%c8_121, %c0_122] : memref<9x256xf32, #tpu.memory_space<vmem>>, vector<1x256xf32>
    %189 = vector.broadcast %188 : vector<1x256xf32> to vector<16x256xf32>
    %190 = arith.mulf %187, %189 : vector<16x256xf32>
    %c8_123 = arith.constant 8 : index
    %c0_124 = arith.constant 0 : index
    %c0_125 = arith.constant 0 : index
    %191 = vector.load %arg8[%c8_123, %c0_124, %c0_125] : memref<9x16x16xbf16, #tpu.memory_space<vmem>>, vector<1x16x16xbf16>
    %192 = vector.shape_cast %191 : vector<1x16x16xbf16> to vector<16x16xbf16>
    %193 = arith.truncf %190 : vector<16x256xf32> to vector<16x256xbf16>
    %cst_126 = arith.constant dense<0.000000e+00> : vector<16x256xf32>
    %194 = tpu.matmul %192, %193, %cst_126 {dimension_numbers = #tpu.dot_dimension_numbers<[1], [0], [0], [1], [0, 0, 1, 1], [], []>} : vector<16x16xbf16>, vector<16x256xbf16>, vector<16x256xf32> -> vector<16x256xf32>
    %195 = arith.addf %186, %194 : vector<16x256xf32>
    %c0_127 = arith.constant 0 : index
    %c0_128 = arith.constant 0 : index
    %196 = vector.load %arg9[%c0_127, %c0_128] : memref<16x1xf32, #tpu.memory_space<vmem>>, vector<16x1xf32>
    %197 = vector.broadcast %196 : vector<16x1xf32> to vector<16x256xf32>
    %198 = arith.addf %195, %197 : vector<16x256xf32>
    %cst_129 = arith.constant 0.000000e+00 : f32
    %cst_130 = arith.constant 6.000000e+00 : f32
    %199 = vector.broadcast %cst_129 : f32 to vector<16x256xf32>
    %200 = arith.maximumf %199, %198 : vector<16x256xf32>
    %201 = vector.broadcast %cst_130 : f32 to vector<16x256xf32>
    %202 = arith.minimumf %201, %200 : vector<16x256xf32>
    %c0_131 = arith.constant 0 : index
    %c0_132 = arith.constant 0 : index
    %c0_133 = arith.constant 0 : index
    %203 = vector.load %arg10[%c0_131, %c0_132, %c0_133] : memref<1x16x256xf32, #tpu.memory_space<vmem>>, vector<1x16x256xf32>
    %204 = vector.shape_cast %203 : vector<1x16x256xf32> to vector<16x256xf32>
    %205 = vector.shape_cast %202 : vector<16x256xf32> to vector<1x16x256xf32>
    tpu.vector_store %arg10[%c0_131, %c0_132, %c0_133], %205 {strides = array<i32>} : memref<1x16x256xf32, #tpu.memory_space<vmem>>, vector<1x16x256xf32>,
    return
  }
  func.func @transform_0(%arg0: i32) -> (i32, i32, i32) {
    %c0_i32 = arith.constant 0 : i32
    %c0_i32_0 = arith.constant 0 : i32
    %c0_i32_1 = arith.constant 0 : i32
    return %arg0, %c0_i32, %c0_i32_0 : i32, i32, i32
  }
  func.func @transform_1(%arg0: i32) -> (i32, i32, i32) {
    %c0_i32 = arith.constant 0 : i32
    %c0_i32_0 = arith.constant 0 : i32
    %c0_i32_1 = arith.constant 0 : i32
    return %arg0, %c0_i32, %c0_i32_0 : i32, i32, i32
  }
  func.func @transform_2(%arg0: i32) -> (i32, i32) {
    %c0_i32 = arith.constant 0 : i32
    %c0_i32_0 = arith.constant 0 : i32
    %c0_i32_1 = arith.constant 0 : i32
    return %c0_i32, %c0_i32_0 : i32, i32
  }
  func.func @transform_3(%arg0: i32) -> (i32, i32) {
    %c0_i32 = arith.constant 0 : i32
    %c0_i32_0 = arith.constant 0 : i32
    %c0_i32_1 = arith.constant 0 : i32
    return %c0_i32, %c0_i32_0 : i32, i32
  }
  func.func @transform_4(%arg0: i32) -> (i32, i32) {
    %c0_i32 = arith.constant 0 : i32
    %c0_i32_0 = arith.constant 0 : i32
    %c0_i32_1 = arith.constant 0 : i32
    return %c0_i32, %c0_i32_0 : i32, i32
  }
  func.func @transform_5(%arg0: i32) -> (i32, i32, i32) {
    %c0_i32 = arith.constant 0 : i32
    %c0_i32_0 = arith.constant 0 : i32
    %c0_i32_1 = arith.constant 0 : i32
    %c0_i32_2 = arith.constant 0 : i32
    return %c0_i32, %c0_i32_0, %c0_i32_1 : i32, i32, i32
  }
  func.func @transform_6(%arg0: i32) -> (i32, i32) {
    %c0_i32 = arith.constant 0 : i32
    %c0_i32_0 = arith.constant 0 : i32
    %c0_i32_1 = arith.constant 0 : i32
    return %c0_i32, %c0_i32_0 : i32, i32
  }
  func.func @transform_7(%arg0: i32) -> (i32, i32, i32) {
    %c0_i32 = arith.constant 0 : i32
    %c0_i32_0 = arith.constant 0 : i32
    %c0_i32_1 = arith.constant 0 : i32
    %c0_i32_2 = arith.constant 0 : i32
    return %c0_i32, %c0_i32_0, %c0_i32_1 : i32, i32, i32
  }
  func.func @transform_8(%arg0: i32) -> (i32, i32) {
    %c0_i32 = arith.constant 0 : i32
    %c0_i32_0 = arith.constant 0 : i32
    %c0_i32_1 = arith.constant 0 : i32
    return %c0_i32, %c0_i32_0 : i32, i32
  }
  func.func @transform_9(%arg0: i32) -> (i32, i32, i32) {
    %c0_i32 = arith.constant 0 : i32
    %c0_i32_0 = arith.constant 0 : i32
    %c0_i32_1 = arith.constant 0 : i32
    return %arg0, %c0_i32, %c0_i32_0 : i32, i32, i32
  }
  func.func @transform_10(%arg0: i32) -> (i32, i32, i32) {
    %c0_i32 = arith.constant 0 : i32
    %c0_i32_0 = arith.constant 0 : i32
    %c0_i32_1 = arith.constant 0 : i32
    return %arg0, %c0_i32, %c0_i32_0 : i32, i32, i32
  }
}

</mosaic_0001>

<llo_original>
// kernel: cm_forward.1
$region0: #{cm_forward.1}
  #allocation0 [shape = 'u32[]', space=smem, size = 0x4, offset = 0x4, fixed_abs, tag = 'smem constant byte address 0x4 - core index']
  #allocation1 [shape = 'u32[144,128]{1,0:T(1,128)}', space=vmem, size = 0x12000, scoped, tag = 'internal scratch']
  %s0 = inlined_call_operand.vmem [shape: f32[2,16,256], index: 0, kind: input, shape index: {}]
  %s1 = inlined_call_operand.vmem [shape: f32[2,16,256], index: 1, kind: input, shape index: {}]
  %s2 = inlined_call_operand.vmem [shape: f32[9,256], index: 2, kind: input, shape index: {}]
  %s3 = inlined_call_operand.vmem [shape: f32[32,2], index: 3, kind: input, shape index: {}]
  %s4 = inlined_call_operand.vmem [shape: f32[32,2], index: 4, kind: input, shape index: {}]
  %s5 = inlined_call_operand.vmem [shape: bf16[9,32,32], index: 5, kind: input, shape index: {}]
  %s6 = inlined_call_operand.vmem [shape: f32[32,1], index: 6, kind: input, shape index: {}]
  %s7 = inlined_call_operand.vmem [shape: bf16[9,16,16], index: 7, kind: input, shape index: {}]
  %s8 = inlined_call_operand.vmem [shape: f32[16,1], index: 8, kind: input, shape index: {}]
  %s9 = inlined_call_operand.vmem [shape: f32[2,16,256], index: 9, kind: output, shape index: {0}]
  %s10 = inlined_call_operand.vmem [shape: f32[2,16,256], index: 10, kind: output, shape index: {1}]
  %11 = xla_tuple %s9, %s10
  %s12 = sld [smem:[#allocation0]]
  $region77: #{cm_forward.1} parent=0
    _
  %s14 = ssub.s32 1, %s12
  %s15 = scalar_select 0, %s14, %s12
  loop: start=0, step=1, limit=4
  $region2: #{cm_forward.1} parent=0 // loop_pre_header
    _
  $region3: #{cm_forward.1} parent=0 // loop_header
    %s17 = sphi 0, %s21
    %p18 = scmp.ge.s32.totalorder %s17, 4
    %s27 = sphi 0, %s29
    %s30 = sphi 0, %s27
    %s31 = sphi 0, %s30
    %s47 = sphi 0, %s31
    %s53 = sphi 0, %s55
    %s56 = sphi 0, %s53
    %s57 = sphi 0, %s56
    %s73 = sphi 0, %s57
    %s77 = sphi 0, %s77
    %s79 = sphi 0, %s77
    %s80 = sphi 0, %s79
    %s94 = sphi 0, %s80
    %s98 = sphi 0, %s98
    %s100 = sphi 0, %s98
    %s101 = sphi 0, %s100
    %s115 = sphi 0, %s101
    %s119 = sphi 0, %s119
    %s121 = sphi 0, %s119
    %s122 = sphi 0, %s121
    %s136 = sphi 0, %s122
    %s140 = sphi 0, %s140
    %s142 = sphi 0, %s140
    %s143 = sphi 0, %s142
    %s157 = sphi 0, %s143
    %s161 = sphi 0, %s161
    %s163 = sphi 0, %s161
    %s164 = sphi 0, %s163
    %s178 = sphi 0, %s164
    %s182 = sphi 0, %s182
    %s184 = sphi 0, %s182
    %s185 = sphi 0, %s184
    %s199 = sphi 0, %s185
    %s203 = sphi 0, %s203
    %s205 = sphi 0, %s203
    %s206 = sphi 0, %s205
    %s220 = sphi 0, %s206
    %s226 = sphi 0, %s228
    %s229 = sphi 0, %s226
    %s230 = sphi 0, %s229
    %s246 = sphi 0, %s230
    %s252 = sphi 0, %s254
    %s255 = sphi 0, %s252
    %s256 = sphi 0, %s255
    %s272 = sphi 0, %s256
  $region4: #{cm_forward.1} parent=0 // loop_header_branch
    %20 = sbr.rel (%p18) target = $region8
  $region5: #{cm_forward.1} parent=0 // loop_body
    %s22 = ssub.s32 %s17, 1
    %s23 = ssub.s32 %s17, 2
    %s24 = sadd.s32 %s17, 1
    %s25 = ssub.s32 %s17, %s24
    %p26 = scmp.eq.s32.totalorder %s25, 0
    %s28 = sadd.s32 %s27, 1
    %s29 = scalar_select %p26, %s27, %s28
    %p32 = pneg %p26
    %p33 = scmp.eq.s32.totalorder %s17, 1
    %p34 = por %p32, %p33
    %p35 = scmp.ne.s32.totalorder %s27, %s30
    %p36 = scmp.eq.s32.totalorder %s17, 0
    %p37 = por %p35, %p36
    %p38 = scmp.ne.s32.totalorder %s27, %s30
    %p39 = scmp.eq.s32.totalorder %s22, 1
    %p40 = por %p38, %p39
    %p41 = scmp.ne.s32.totalorder %s30, %s31
    %p42 = scmp.eq.s32.totalorder %s22, 0
    %p43 = por %p41, %p42
    %p44 = scmp.ne.s32.totalorder %s30, %s31
    %p45 = scmp.eq.s32.totalorder %s23, 1
    %p46 = por %p44, %p45
    %p48 = scmp.ne.s32.totalorder %s31, %s47
    %p49 = scmp.eq.s32.totalorder %s23, 0
    %p50 = por %p48, %p49
    %s51 = ssub.s32 %s17, %s24
    %p52 = scmp.eq.s32.totalorder %s51, 0
    %s54 = sadd.s32 %s53, 1
    %s55 = scalar_select %p52, %s53, %s54
    %p58 = pneg %p52
    %p59 = scmp.eq.s32.totalorder %s17, 1
    %p60 = por %p58, %p59
    %p61 = scmp.ne.s32.totalorder %s53, %s56
    %p62 = scmp.eq.s32.totalorder %s17, 0
    %p63 = por %p61, %p62
    %p64 = scmp.ne.s32.totalorder %s53, %s56
    %p65 = scmp.eq.s32.totalorder %s22, 1
    %p66 = por %p64, %p65
    %p67 = scmp.ne.s32.totalorder %s56, %s57
    %p68 = scmp.eq.s32.totalorder %s22, 0
    %p69 = por %p67, %p68
    %p70 = scmp.ne.s32.totalorder %s56, %s57
    %p71 = scmp.eq.s32.totalorder %s23, 1
    %p72 = por %p70, %p71
    %p74 = scmp.ne.s32.totalorder %s57, %s73
    %p75 = scmp.eq.s32.totalorder %s23, 0
    %p76 = por %p74, %p75
    %s78 = sadd.s32 %s77, 1
    %p81 = scmp.eq.s32.totalorder %s17, 1
    %p82 = scmp.ne.s32.totalorder %s77, %s79
    %p83 = scmp.eq.s32.totalorder %s17, 0
    %p84 = por %p82, %p83
    %p85 = scmp.ne.s32.totalorder %s77, %s79
    %p86 = scmp.eq.s32.totalorder %s22, 1
    %p87 = por %p85, %p86
    %p88 = scmp.ne.s32.totalorder %s79, %s80
    %p89 = scmp.eq.s32.totalorder %s22, 0
    %p90 = por %p88, %p89
    %p91 = scmp.ne.s32.totalorder %s79, %s80
    %p92 = scmp.eq.s32.totalorder %s23, 1
    %p93 = por %p91, %p92
    %p95 = scmp.ne.s32.totalorder %s80, %s94
    %p96 = scmp.eq.s32.totalorder %s23, 0
    %p97 = por %p95, %p96
    %s99 = sadd.s32 %s98, 1
    %p102 = scmp.eq.s32.totalorder %s17, 1
    %p103 = scmp.ne.s32.totalorder %s98, %s100
    %p104 = scmp.eq.s32.totalorder %s17, 0
    %p105 = por %p103, %p104
    %p106 = scmp.ne.s32.totalorder %s98, %s100
    %p107 = scmp.eq.s32.totalorder %s22, 1
    %p108 = por %p106, %p107
    %p109 = scmp.ne.s32.totalorder %s100, %s101
    %p110 = scmp.eq.s32.totalorder %s22, 0
    %p111 = por %p109, %p110
    %p112 = scmp.ne.s32.totalorder %s100, %s101
    %p113 = scmp.eq.s32.totalorder %s23, 1
    %p114 = por %p112, %p113
    %p116 = scmp.ne.s32.totalorder %s101, %s115
    %p117 = scmp.eq.s32.totalorder %s23, 0
    %p118 = por %p116, %p117
    %s120 = sadd.s32 %s119, 1
    %p123 = scmp.eq.s32.totalorder %s17, 1
    %p124 = scmp.ne.s32.totalorder %s119, %s121
    %p125 = scmp.eq.s32.totalorder %s17, 0
    %p126 = por %p124, %p125
    %p127 = scmp.ne.s32.totalorder %s119, %s121
    %p128 = scmp.eq.s32.totalorder %s22, 1
    %p129 = por %p127, %p128
    %p130 = scmp.ne.s32.totalorder %s121, %s122
    %p131 = scmp.eq.s32.totalorder %s22, 0
    %p132 = por %p130, %p131
    %p133 = scmp.ne.s32.totalorder %s121, %s122
    %p134 = scmp.eq.s32.totalorder %s23, 1
    %p135 = por %p133, %p134
    %p137 = scmp.ne.s32.totalorder %s122, %s136
    %p138 = scmp.eq.s32.totalorder %s23, 0
    %p139 = por %p137, %p138
    %s141 = sadd.s32 %s140, 1
    %p144 = scmp.eq.s32.totalorder %s17, 1
    %p145 = scmp.ne.s32.totalorder %s140, %s142
    %p146 = scmp.eq.s32.totalorder %s17, 0
    %p147 = por %p145, %p146
    %p148 = scmp.ne.s32.totalorder %s140, %s142
    %p149 = scmp.eq.s32.totalorder %s22, 1
    %p150 = por %p148, %p149
    %p151 = scmp.ne.s32.totalorder %s142, %s143
    %p152 = scmp.eq.s32.totalorder %s22, 0
    %p153 = por %p151, %p152
    %p154 = scmp.ne.s32.totalorder %s142, %s143
    %p155 = scmp.eq.s32.totalorder %s23, 1
    %p156 = por %p154, %p155
    %p158 = scmp.ne.s32.totalorder %s143, %s157
    %p159 = scmp.eq.s32.totalorder %s23, 0
    %p160 = por %p158, %p159
    %s162 = sadd.s32 %s161, 1
    %p165 = scmp.eq.s32.totalorder %s17, 1
    %p166 = scmp.ne.s32.totalorder %s161, %s163
    %p167 = scmp.eq.s32.totalorder %s17, 0
    %p168 = por %p166, %p167
    %p169 = scmp.ne.s32.totalorder %s161, %s163
    %p170 = scmp.eq.s32.totalorder %s22, 1
    %p171 = por %p169, %p170
    %p172 = scmp.ne.s32.totalorder %s163, %s164
    %p173 = scmp.eq.s32.totalorder %s22, 0
    %p174 = por %p172, %p173
    %p175 = scmp.ne.s32.totalorder %s163, %s164
    %p176 = scmp.eq.s32.totalorder %s23, 1
    %p177 = por %p175, %p176
    %p179 = scmp.ne.s32.totalorder %s164, %s178
    %p180 = scmp.eq.s32.totalorder %s23, 0
    %p181 = por %p179, %p180
    %s183 = sadd.s32 %s182, 1
    %p186 = scmp.eq.s32.totalorder %s17, 1
    %p187 = scmp.ne.s32.totalorder %s182, %s184
    %p188 = scmp.eq.s32.totalorder %s17, 0
    %p189 = por %p187, %p188
    %p190 = scmp.ne.s32.totalorder %s182, %s184
    %p191 = scmp.eq.s32.totalorder %s22, 1
    %p192 = por %p190, %p191
    %p193 = scmp.ne.s32.totalorder %s184, %s185
    %p194 = scmp.eq.s32.totalorder %s22, 0
    %p195 = por %p193, %p194
    %p196 = scmp.ne.s32.totalorder %s184, %s185
    %p197 = scmp.eq.s32.totalorder %s23, 1
    %p198 = por %p196, %p197
    %p200 = scmp.ne.s32.totalorder %s185, %s199
    %p201 = scmp.eq.s32.totalorder %s23, 0
    %p202 = por %p200, %p201
    %s204 = sadd.s32 %s203, 1
    %p207 = scmp.eq.s32.totalorder %s17, 1
    %p208 = scmp.ne.s32.totalorder %s203, %s205
    %p209 = scmp.eq.s32.totalorder %s17, 0
    %p210 = por %p208, %p209
    %p211 = scmp.ne.s32.totalorder %s203, %s205
    %p212 = scmp.eq.s32.totalorder %s22, 1
    %p213 = por %p211, %p212
    %p214 = scmp.ne.s32.totalorder %s205, %s206
    %p215 = scmp.eq.s32.totalorder %s22, 0
    %p216 = por %p214, %p215
    %p217 = scmp.ne.s32.totalorder %s205, %s206
    %p218 = scmp.eq.s32.totalorder %s23, 1
    %p219 = por %p217, %p218
    %p221 = scmp.ne.s32.totalorder %s206, %s220
    %p222 = scmp.eq.s32.totalorder %s23, 0
    %p223 = por %p221, %p222
    %s224 = ssub.s32 %s17, %s24
    %p225 = scmp.eq.s32.totalorder %s224, 0
    %s227 = sadd.s32 %s226, 1
    %s228 = scalar_select %p225, %s226, %s227
    %p231 = pneg %p225
    %p232 = scmp.eq.s32.totalorder %s17, 1
    %p233 = por %p231, %p232
    %p234 = scmp.ne.s32.totalorder %s226, %s229
    %p235 = scmp.eq.s32.totalorder %s17, 0
    %p236 = por %p234, %p235
    %p237 = scmp.ne.s32.totalorder %s226, %s229
    %p238 = scmp.eq.s32.totalorder %s22, 1
    %p239 = por %p237, %p238
    %p240 = scmp.ne.s32.totalorder %s229, %s230
    %p241 = scmp.eq.s32.totalorder %s22, 0
    %p242 = por %p240, %p241
    %p243 = scmp.ne.s32.totalorder %s229, %s230
    %p244 = scmp.eq.s32.totalorder %s23, 1
    %p245 = por %p243, %p244
    %p247 = scmp.ne.s32.totalorder %s230, %s246
    %p248 = scmp.eq.s32.totalorder %s23, 0
    %p249 = por %p247, %p248
    %s250 = ssub.s32 %s17, %s24
    %p251 = scmp.eq.s32.totalorder %s250, 0
    %s253 = sadd.s32 %s252, 1
    %s254 = scalar_select %p251, %s252, %s253
    %p257 = pneg %p251
    %p258 = scmp.eq.s32.totalorder %s17, 1
    %p259 = por %p257, %p258
    %p260 = scmp.ne.s32.totalorder %s252, %s255
    %p261 = scmp.eq.s32.totalorder %s17, 0
    %p262 = por %p260, %p261
    %p263 = scmp.ne.s32.totalorder %s252, %s255
    %p264 = scmp.eq.s32.totalorder %s22, 1
    %p265 = por %p263, %p264
    %p266 = scmp.ne.s32.totalorder %s255, %s256
    %p267 = scmp.eq.s32.totalorder %s22, 0
    %p268 = por %p266, %p267
    %p269 = scmp.ne.s32.totalorder %s255, %s256
    %p270 = scmp.eq.s32.totalorder %s23, 1
    %p271 = por %p269, %p270
    %p273 = scmp.ne.s32.totalorder %s256, %s272
    %p274 = scmp.eq.s32.totalorder %s23, 0
    %p275 = por %p273, %p274
    %p276 = scmp.le.s32.totalorder 1, %s17
    %p277 = scmp.lt.s32.totalorder %s17, 3
    %p278 = pnand %p276, %p277
    %p279 = pneg %p278
    // Predicated region
    $region9: #{cm_forward.1} parent=5 // pred_check
      _
    $region10: #{cm_forward.1} parent=5 // pred_check_branch
      %281 = sbr.rel (%p278) target = $region12
    $region11: #{cm_forward.1} parent=5 // pred_region
      %s282 = ssub.s32 %s17, 1
      // Predicated region
      $region13: #{cm_forward.1} parent=11 // pred_check
        %p283 = pneg %p90
      $region14: #{cm_forward.1} parent=11 // pred_check_branch
        %285 = sbr.rel (%p283) target = $region16
      $region15: #{cm_forward.1} parent=11 // pred_region
        _
      $region16: #{cm_forward.1} parent=11 // pred_fallthru
        _
      // Predicated region
      $region17: #{cm_forward.1} parent=11 // pred_check
        %p286 = pneg %p111
      $region18: #{cm_forward.1} parent=11 // pred_check_branch
        %288 = sbr.rel (%p286) target = $region20
      $region19: #{cm_forward.1} parent=11 // pred_region
        _
      $region20: #{cm_forward.1} parent=11 // pred_fallthru
        _
      // Predicated region
      $region21: #{cm_forward.1} parent=11 // pred_check
        %p289 = pneg %p132
      $region22: #{cm_forward.1} parent=11 // pred_check_branch
        %291 = sbr.rel (%p289) target = $region24
      $region23: #{cm_forward.1} parent=11 // pred_region
        _
      $region24: #{cm_forward.1} parent=11 // pred_fallthru
        _
      // Predicated region
      $region25: #{cm_forward.1} parent=11 // pred_check
        %p292 = pneg %p153
      $region26: #{cm_forward.1} parent=11 // pred_check_branch
        %294 = sbr.rel (%p292) target = $region28
      $region27: #{cm_forward.1} parent=11 // pred_region
        _
      $region28: #{cm_forward.1} parent=11 // pred_fallthru
        _
      // Predicated region
      $region29: #{cm_forward.1} parent=11 // pred_check
        %p295 = pneg %p174
      $region30: #{cm_forward.1} parent=11 // pred_check_branch
        %297 = sbr.rel (%p295) target = $region32
      $region31: #{cm_forward.1} parent=11 // pred_region
        _
      $region32: #{cm_forward.1} parent=11 // pred_fallthru
        _
      // Predicated region
      $region33: #{cm_forward.1} parent=11 // pred_check
        %p298 = pneg %p195
      $region34: #{cm_forward.1} parent=11 // pred_check_branch
        %300 = sbr.rel (%p298) target = $region36
      $region35: #{cm_forward.1} parent=11 // pred_region
        _
      $region36: #{cm_forward.1} parent=11 // pred_fallthru
        _
      // Predicated region
      $region37: #{cm_forward.1} parent=11 // pred_check
        %p301 = pneg %p216
      $region38: #{cm_forward.1} parent=11 // pred_check_branch
        %303 = sbr.rel (%p301) target = $region40
      $region39: #{cm_forward.1} parent=11 // pred_region
        _
      $region40: #{cm_forward.1} parent=11 // pred_fallthru
        _
    $region12: #{cm_forward.1} parent=5 // pred_fallthru
      _
    %p304 = scmp.lt.s32.totalorder %s17, 2
    // Predicated region
    $region41: #{cm_forward.1} parent=5 // pred_check
      %p305 = pneg %p304
    $region42: #{cm_forward.1} parent=5 // pred_check_branch
      %307 = sbr.rel (%p305) target = $region44
    $region43: #{cm_forward.1} parent=5 // pred_region
      // Predicated region
      $region45: #{cm_forward.1} parent=43 // pred_check
        %p308 = pneg %p37
      $region46: #{cm_forward.1} parent=43 // pred_check_branch
        %310 = sbr.rel (%p308) target = $region48
      $region47: #{cm_forward.1} parent=43 // pred_region
        %p311 = scmp.lt.s32.totalorder %s17, 1
        %s312 = scalar_select %p311, %s17, 1
        %s313 = smul.addr %s312, 4
        %s314 = smul.addr %s313, 8
        %s315 = scalar_lea.vmem %s0, %s314
      $region48: #{cm_forward.1} parent=43 // pred_fallthru
        _
      // Predicated region
      $region49: #{cm_forward.1} parent=43 // pred_check
        %p316 = pneg %p63
      $region50: #{cm_forward.1} parent=43 // pred_check_branch
        %318 = sbr.rel (%p316) target = $region52
      $region51: #{cm_forward.1} parent=43 // pred_region
        %p319 = scmp.lt.s32.totalorder %s17, 1
        %s320 = scalar_select %p319, %s17, 1
        %s321 = smul.addr %s320, 4
        %s322 = smul.addr %s321, 8
        %s323 = scalar_lea.vmem %s1, %s322
      $region52: #{cm_forward.1} parent=43 // pred_fallthru
        _
    $region44: #{cm_forward.1} parent=5 // pred_fallthru
      _
    %p324 = scmp.le.s32.totalorder 1, %s17
    %p325 = scmp.lt.s32.totalorder %s17, 3
    %p326 = pnand %p324, %p325
    %p327 = pneg %p326
    // Predicated region
    $region53: #{cm_forward.1} parent=5 // pred_check
      _
    $region54: #{cm_forward.1} parent=5 // pred_check_branch
      %329 = sbr.rel (%p326) target = $region56
    $region55: #{cm_forward.1} parent=5 // pred_region
      %s330 = ssub.s32 %s17, 1
      %p331 = scmp.lt.s32.totalorder %s22, 1
      %s332 = scalar_select %p331, %s22, 1
      %s333 = smul.addr %s332, 4
      %s334 = smul.addr %s333, 8
      %s335 = scalar_lea.vmem %s0, %s334
      %p336 = pneg %p43
      %p337 = pneg %p40
      %p338 = scmp.lt.s32.totalorder %s22, 1
      %s339 = scalar_select %p338, %s22, 1
      %s340 = smul.addr %s339, 4
      %s341 = smul.addr %s340, 8
      %s342 = scalar_lea.vmem %s1, %s341
      %p343 = pneg %p69
      %p344 = pneg %p66
      %p345 = pneg %p90
      %p346 = pneg %p87
      %p347 = pneg %p111
      %p348 = pneg %p108
      %p349 = pneg %p132
      %p350 = pneg %p129
      %p351 = pneg %p153
      %p352 = pneg %p150
      %p353 = pneg %p174
      %p354 = pneg %p171
      %p355 = pneg %p195
      %p356 = pneg %p192
      %p357 = pneg %p216
      %p358 = pneg %p213
      %p359 = pneg %p242
      %p360 = pneg %p239
      %p361 = scmp.lt.s32.totalorder %s22, 1
      %s362 = scalar_select %p361, %s22, 1
      %s363 = smul.addr %s362, 4
      %s364 = smul.addr %s363, 8
      %s365 = scalar_lea.vmem %s9, %s364
      %p366 = pneg %p268
      %p367 = pneg %p265
      %p368 = scmp.lt.s32.totalorder %s22, 1
      %s369 = scalar_select %p368, %s22, 1
      %s370 = smul.addr %s369, 4
      %s371 = smul.addr %s370, 8
      %s372 = scalar_lea.vmem %s10, %s371
      %p373 = scmp.lt.s32.totalorder %s22, 1
      %s374 = scalar_select %p373, %s22, 1
      %s375 = smul.addr %s374, 4
      %s376 = smul.addr %s375, 8
      %s377 = scalar_lea.vmem %s0, %s376
      %p378 = scmp.lt.s32.totalorder %s22, 1
      %s379 = scalar_select %p378, %s22, 1
      %s380 = smul.addr %s379, 4
      %s381 = smul.addr %s380, 8
      %s382 = scalar_lea.vmem %s1, %s381
      %p383 = scmp.lt.s32.totalorder %s22, 1
      %s384 = scalar_select %p383, %s22, 1
      %s385 = smul.addr %s384, 4
      %s386 = smul.addr %s385, 8
      %s387 = scalar_lea.vmem %s9, %s386
      %p388 = scmp.lt.s32.totalorder %s22, 1
      %s389 = scalar_select %p388, %s22, 1
      %s390 = smul.addr %s389, 4
      %s391 = smul.addr %s390, 8
      %s392 = scalar_lea.vmem %s10, %s391
      %v394 = vld [vmem:[%s377] sm:$0xff]
      %v395 = vld [vmem:[%s377 + $0x8] sm:$0xff]
      %v396 = vld [vmem:[%s377 + $0x10] sm:$0xff]
      %v397 = vld [vmem:[%s377 + $0x18] sm:$0xff]
      %v398 = vld [vmem:[%s382] sm:$0xff]
      %v399 = vld [vmem:[%s382 + $0x8] sm:$0xff]
      %v400 = vld [vmem:[%s382 + $0x10] sm:$0xff]
      %v401 = vld [vmem:[%s382 + $0x18] sm:$0xff]
      %v402 = vadd.f32 %v394, %v395
      %403 = vadd.xlane.f32.xlu0 %v402
      %v404 = vpop.xlane.xlu0 %403
      %v405 = vadd.f32 %v396, %v397
      %406 = vadd.xlane.f32.xlu0 %v405
      %v407 = vpop.xlane.xlu0 %406
      %v408 = vadd.f32 %v398, %v399
      %409 = vadd.xlane.f32.xlu0 %v408
      %v410 = vpop.xlane.xlu0 %409
      %v411 = vadd.f32 %v400, %v401
      %412 = vadd.xlane.f32.xlu0 %v411
      %v413 = vpop.xlane.xlu0 %412
      %v414 = vrcp.pop 256.0
      %v415 = vmul.f32 %v404, %v414
      %v416 = vmul.f32 %v407, %v414
      %v417 = vmul.f32 %v410, %v414
      %v418 = vmul.f32 %v413, %v414
      %v419 = vld [vmem:[%s3] sm:$0xff]
      %v420 = vld [vmem:[%s3 + $0x8] sm:$0xff]
      %v421 = vld [vmem:[%s3 + $0x10] sm:$0xff]
      %v422 = vld [vmem:[%s3 + $0x18] sm:$0xff]
      %v423 = vmul.f32 %v419, %v415
      %v424 = vmul.f32 %v420, %v416
      %v425 = vmul.f32 %v421, %v417
      %v426 = vmul.f32 %v422, %v418
      %vm427 = vcmask 15360
      %v428 = vsel %vm427, %v423, 0.0
      %v429 = vsel %vm427, %v424, 0.0
      %v430 = vadd.f32 %v428, %v429
      %v431 = vsel %vm427, %v425, 0.0
      %v432 = vadd.f32 %v430, %v431
      %v433 = vsel %vm427, %v426, 0.0
      %v434 = vadd.f32 %v432, %v433
      %v435 = vrot.slane %v434, 4
      %v436 = vadd.f32 %v434, %v435
      %v437 = vrot.slane %v436, 2
      %v438 = vadd.f32 %v436, %v437
      %v439 = vrot.slane %v438, 1
      %v440 = vadd.f32 %v438, %v439
      %v441 = vmax.f32 %v440, 0.0
      %v442 = vld [vmem:[%s4] sm:$0xff]
      %v443 = vld [vmem:[%s4 + $0x8] sm:$0xff]
      %v444 = vld [vmem:[%s4 + $0x10] sm:$0xff]
      %v445 = vld [vmem:[%s4 + $0x18] sm:$0xff]
      %v446 = vmul.f32 %v442, %v441
      %v447 = vmul.f32 %v443, %v441
      %v448 = vmul.f32 %v444, %v441
      %v449 = vmul.f32 %v445, %v441
      %v450 = vsel %vm427, %v446, 0.0
      %451 = vadd.xlane.f32.xlu0 %v450
      %v452 = vpop.xlane.xlu0 %451
      %v453 = vsel %vm427, %v447, 0.0
      %454 = vadd.xlane.f32.xlu0 %v453
      %v455 = vpop.xlane.xlu0 %454
      %v456 = vsel %vm427, %v448, 0.0
      %457 = vadd.xlane.f32.xlu0 %v456
      %v458 = vpop.xlane.xlu0 %457
      %v459 = vsel %vm427, %v449, 0.0
      %460 = vadd.xlane.f32.xlu0 %v459
      %v461 = vpop.xlane.xlu0 %460
      %v462 = vmul.f32 %v394, %v452
      %v463 = vmul.f32 %v395, %v452
      %v464 = vmul.f32 %v396, %v455
      %v465 = vmul.f32 %v397, %v455
      %v466 = vmul.f32 %v398, %v458
      %v467 = vmul.f32 %v399, %v458
      %v468 = vmul.f32 %v400, %v461
      %v469 = vmul.f32 %v401, %v461
      %v470 = vxor.u32 %v462, 2147483648
      %v471 = vxor.u32 %v463, 2147483648
      %v472 = vxor.u32 %v464, 2147483648
      %v473 = vxor.u32 %v465, 2147483648
      %v474 = vxor.u32 %v466, 2147483648
      %v475 = vxor.u32 %v467, 2147483648
      %v476 = vxor.u32 %v468, 2147483648
      %v477 = vxor.u32 %v469, 2147483648
      %v478 = vmul.f32 %v470, 1.442695
      %v479 = vpow.pop %v478
      %v480 = vmul.f32 %v471, 1.442695
      %v481 = vpow.pop %v480
      %v482 = vmul.f32 %v472, 1.442695
      %v483 = vpow.pop %v482
      %v484 = vmul.f32 %v473, 1.442695
      %v485 = vpow.pop %v484
      %v486 = vmul.f32 %v474, 1.442695
      %v487 = vpow.pop %v486
      %v488 = vmul.f32 %v475, 1.442695
      %v489 = vpow.pop %v488
      %v490 = vmul.f32 %v476, 1.442695
      %v491 = vpow.pop %v490
      %v492 = vmul.f32 %v477, 1.442695
      %v493 = vpow.pop %v492
      %v494 = vadd.f32 %v479, 1.0
      %v495 = vadd.f32 %v481, 1.0
      %v496 = vadd.f32 %v483, 1.0
      %v497 = vadd.f32 %v485, 1.0
      %v498 = vadd.f32 %v487, 1.0
      %v499 = vadd.f32 %v489, 1.0
      %v500 = vadd.f32 %v491, 1.0
      %v501 = vadd.f32 %v493, 1.0
      %v502 = vrcp.pop %v494
      %v503 = vmul.f32 1.0, %v502
      %v504 = vrcp.pop %v495
      %v505 = vmul.f32 1.0, %v504
      %v506 = vrcp.pop %v496
      %v507 = vmul.f32 1.0, %v506
      %v508 = vrcp.pop %v497
      %v509 = vmul.f32 1.0, %v508
      %v510 = vrcp.pop %v498
      %v511 = vmul.f32 1.0, %v510
      %v512 = vrcp.pop %v499
      %v513 = vmul.f32 1.0, %v512
      %v514 = vrcp.pop %v500
      %v515 = vmul.f32 1.0, %v514
      %v516 = vrcp.pop %v501
      %v517 = vmul.f32 1.0, %v516
      %518 = vrot.lane.b32.xlu0 %v503, 17
      %v519 = vpop.permute.xlu0 %518
      %520 = vrot.lane.b32.xlu0 %v507, 17
      %v521 = vpop.permute.xlu0 %520
      %522 = vrot.lane.b32.xlu0 %v511, 17
      %v523 = vpop.permute.xlu0 %522
      %524 = vrot.lane.b32.xlu0 %v515, 17
      %v525 = vpop.permute.xlu0 %524
      %526 = vrot.lane.b32.xlu0 %v505, 17
      %v527 = vpop.permute.xlu0 %526
      %528 = vrot.lane.b32.xlu0 %v509, 17
      %v529 = vpop.permute.xlu0 %528
      %530 = vrot.lane.b32.xlu0 %v513, 17
      %v531 = vpop.permute.xlu0 %530
      %532 = vrot.lane.b32.xlu0 %v517, 17
      %v533 = vpop.permute.xlu0 %532
      %v534 = vlaneseq
      %v535 = vand.u32 %v534, 127
      %vm536 = vcmp.lt.s32.totalorder %v535, 17
      %v537 = vsel %vm536, %v519, %v527
      %v538 = vsel %vm536, %v521, %v529
      %v539 = vsel %vm536, %v523, %v531
      %v540 = vsel %vm536, %v525, %v533
      %v541 = vsel %vm536, %v527, %v519
      %v542 = vsel %vm536, %v529, %v521
      %v543 = vsel %vm536, %v531, %v523
      %v544 = vsel %vm536, %v533, %v525
      %v545 = vld [vmem:[%s2] ss:$8 sm:$0x3]
      %v547 = vlaneseq
      %v548 = vshrl.u32 %v547, 7
      %v549 = vsub.s32 0, %v548
      %v550 = vrot.slane %v545, %v549
      %v551 = vlaneseq
      %v552 = vshrl.u32 %v551, 7
      %v553 = vsub.s32 1, %v552
      %v554 = vrot.slane %v545, %v553
      %v557 = vmul.f32 %v541, %v550
      %v558 = vmul.f32 %v537, %v554
      %v559 = vmul.f32 %v542, %v550
      %v560 = vmul.f32 %v538, %v554
      %v561 = vmul.f32 %v543, %v550
      %v562 = vmul.f32 %v539, %v554
      %v563 = vmul.f32 %v544, %v550
      %v564 = vmul.f32 %v540, %v554
      %v565 = vld [vmem:[%s5] sm:$0xf]
      %v566 = vld [vmem:[%s5 + $0x4] sm:$0xf]
      %v567 = vld [vmem:[%s5 + $0x8] sm:$0xf]
      %v568 = vld [vmem:[%s5 + $0xc] sm:$0xf]
      %v569 = vpack.c.bf16 %v559, %v557
      %v570 = vpack.c.bf16 %v560, %v558
      %v571 = vpack.c.bf16 %v563, %v561
      %v572 = vpack.c.bf16 %v564, %v562
      %573 = vrot.lane.b32.xlu0 %v503, 16
      %v574 = vpop.permute.xlu0 %573
      %575 = vrot.lane.b32.xlu0 %v507, 16
      %v576 = vpop.permute.xlu0 %575
      %577 = vrot.lane.b32.xlu0 %v511, 16
      %v578 = vpop.permute.xlu0 %577
      %579 = vrot.lane.b32.xlu0 %v515, 16
      %v580 = vpop.permute.xlu0 %579
      %581 = vrot.lane.b32.xlu0 %v505, 16
      %v582 = vpop.permute.xlu0 %581
      %583 = vrot.lane.b32.xlu0 %v509, 16
      %v584 = vpop.permute.xlu0 %583
      %585 = vrot.lane.b32.xlu0 %v513, 16
      %v586 = vpop.permute.xlu0 %585
      %587 = vrot.lane.b32.xlu0 %v517, 16
      %v588 = vpop.permute.xlu0 %587
      %vm589 = vcmp.lt.s32.totalorder %v535, 16
      %v590 = vsel %vm589, %v574, %v582
      %v591 = vsel %vm589, %v576, %v584
      %v592 = vsel %vm589, %v578, %v586
      %v593 = vsel %vm589, %v580, %v588
      %v594 = vsel %vm589, %v582, %v574
      %v595 = vsel %vm589, %v584, %v576
      %v596 = vsel %vm589, %v586, %v578
      %v597 = vsel %vm589, %v588, %v580
      %s598 = scalar_lea.vmem %s2, 1
      %v599 = vld [vmem:[%s598] ss:$8 sm:$0x3]
      %v601 = vlaneseq
      %v602 = vshrl.u32 %v601, 7
      %v603 = vsub.s32 0, %v602
      %v604 = vrot.slane %v599, %v603
      %v605 = vlaneseq
      %v606 = vshrl.u32 %v605, 7
      %v607 = vsub.s32 1, %v606
      %v608 = vrot.slane %v599, %v607
      %v611 = vmul.f32 %v594, %v604
      %v612 = vmul.f32 %v590, %v608
      %v613 = vmul.f32 %v595, %v604
      %v614 = vmul.f32 %v591, %v608
      %v615 = vmul.f32 %v596, %v604
      %v616 = vmul.f32 %v592, %v608
      %v617 = vmul.f32 %v597, %v604
      %v618 = vmul.f32 %v593, %v608
      %s619 = scalar_lea.vmem %s5, 16
      %v620 = vld [vmem:[%s619] sm:$0xf]
      %v621 = vld [vmem:[%s619 + $0x4] sm:$0xf]
      %v622 = vld [vmem:[%s619 + $0x8] sm:$0xf]
      %v623 = vld [vmem:[%s619 + $0xc] sm:$0xf]
      %v624 = vpack.c.bf16 %v613, %v611
      %v625 = vpack.c.bf16 %v614, %v612
      %v626 = vpack.c.bf16 %v617, %v615
      %v627 = vpack.c.bf16 %v618, %v616
      %v632 = vunpack.c.l.b16 %v620
      %v633 = vunpack.c.l.b16 %v621
      %v634 = vunpack.c.l.b16 %v622
      %v635 = vunpack.c.l.b16 %v623
      %v636 = vpack.c.b16 %v633, %v632
      %v637 = vpack.c.b16 %v635, %v634
      %vm638 = vcmask 261120
      %v640 = vsel %vm638, %v636, 0
      %v643 = vsel %vm638, %v637, 0
      %645 = vmatprep.subr.bf16.mxu0 0
      %646 = vmatpush1.bf16.msra.mxu0 0
      %647 = vmatprep.subr.bf16.mxu0 0
      %648 = vmatpush1.bf16.msra.mxu0 0
      %649 = vmatprep.subr.bf16.mxu0 0
      %650 = vmatpush1.bf16.msra.mxu0 0
      %651 = vmatprep.subr.bf16.mxu0 0
      %652 = vmatpush1.bf16.msra.mxu0 0
      %653 = vmatprep.subr.bf16.mxu0 0
      %654 = vmatpush1.bf16.msra.mxu0 0
      %655 = vmatprep.subr.bf16.mxu0 0
      %656 = vmatpush1.bf16.msra.mxu0 0
      %657 = vmatprep.subr.bf16.mxu0 %v627
      %658 = vmatpush1.bf16.msra.mxu0 %v626
      %659 = vmatprep.subr.bf16.mxu0 %v625
      %660 = vmatpush1.bf16.msra.mxu0 %v624
      %661 = vmatprep.subr.bf16.mxu0 0
      %662 = vmatpush2.bf16.msra.mxu0 0
      %663 = vmatprep.subr.bf16.mxu0 0
      %664 = vmatpush2.bf16.msra.mxu0 0
      %665 = vmatprep.subr.bf16.mxu0 0
      %666 = vmatpush2.bf16.msra.mxu0 0
      %667 = vmatprep.subr.bf16.mxu0 0
      %668 = vmatpush2.bf16.msra.mxu0 0
      %669 = vmatprep.subr.bf16.mxu0 0
      %670 = vmatpush2.bf16.msra.mxu0 0
      %671 = vmatprep.subr.bf16.mxu0 0
      %672 = vmatpush2.bf16.msra.mxu0 0
      %673 = vmatprep.subr.bf16.mxu0 0
      %674 = vmatpush2.bf16.msra.mxu0 0
      %675 = vmatprep.subr.bf16.mxu0 0
      %676 = vmatpush2.bf16.msra.mxu0 0
      %677 = vmatprep.mubr.bf16.mxu0 0
      %678 = vmatmul.mubr.bf16.gmra.mxu0 %v640
      %v679 = vpop.f32.mrf.mxu0
      %v680 = vadd.f32 0.0, %v679
      %v681 = vpop.f32.mrf.mxu0
      %v682 = vadd.f32 0.0, %v681
      %v683 = vpop.f32.mrf.mxu0
      %v684 = vadd.f32 0.0, %v683
      %v685 = vpop.f32.mrf.mxu0
      %v686 = vadd.f32 0.0, %v685
      %687 = vmatprep.mubr.bf16.mxu0 0
      %688 = vmatmul.mubr.bf16.gmra.mxu0 %v643
      %v689 = vpop.f32.mrf.mxu0
      %v690 = vadd.f32 0.0, %v689
      %v691 = vpop.f32.mrf.mxu0
      %v692 = vadd.f32 0.0, %v691
      %v693 = vpop.f32.mrf.mxu0
      %v694 = vadd.f32 0.0, %v693
      %v695 = vpop.f32.mrf.mxu0
      %v696 = vadd.f32 0.0, %v695
      %697 = vdwg.mxu0
      %v702 = vunpack.c.l.b16 %v565
      %v703 = vunpack.c.l.b16 %v566
      %v704 = vunpack.c.l.b16 %v567
      %v705 = vunpack.c.l.b16 %v568
      %v706 = vpack.c.b16 %v703, %v702
      %v707 = vpack.c.b16 %v705, %v704
      %v709 = vsel %vm638, %v706, 0
      %v712 = vsel %vm638, %v707, 0
      %714 = vmatprep.subr.bf16.mxu0 0
      %715 = vmatpush1.bf16.msra.mxu0 0
      %716 = vmatprep.subr.bf16.mxu0 0
      %717 = vmatpush1.bf16.msra.mxu0 0
      %718 = vmatprep.subr.bf16.mxu0 0
      %719 = vmatpush1.bf16.msra.mxu0 0
      %720 = vmatprep.subr.bf16.mxu0 0
      %721 = vmatpush1.bf16.msra.mxu0 0
      %722 = vmatprep.subr.bf16.mxu0 0
      %723 = vmatpush1.bf16.msra.mxu0 0
      %724 = vmatprep.subr.bf16.mxu0 0
      %725 = vmatpush1.bf16.msra.mxu0 0
      %726 = vmatprep.subr.bf16.mxu0 %v572
      %727 = vmatpush1.bf16.msra.mxu0 %v571
      %728 = vmatprep.subr.bf16.mxu0 %v570
      %729 = vmatpush1.bf16.msra.mxu0 %v569
      %730 = vmatprep.subr.bf16.mxu0 0
      %731 = vmatpush2.bf16.msra.mxu0 0
      %732 = vmatprep.subr.bf16.mxu0 0
      %733 = vmatpush2.bf16.msra.mxu0 0
      %734 = vmatprep.subr.bf16.mxu0 0
      %735 = vmatpush2.bf16.msra.mxu0 0
      %736 = vmatprep.subr.bf16.mxu0 0
      %737 = vmatpush2.bf16.msra.mxu0 0
      %738 = vmatprep.subr.bf16.mxu0 0
      %739 = vmatpush2.bf16.msra.mxu0 0
      %740 = vmatprep.subr.bf16.mxu0 0
      %741 = vmatpush2.bf16.msra.mxu0 0
      %742 = vmatprep.subr.bf16.mxu0 0
      %743 = vmatpush2.bf16.msra.mxu0 0
      %744 = vmatprep.subr.bf16.mxu0 0
      %745 = vmatpush2.bf16.msra.mxu0 0
      %746 = vmatprep.mubr.bf16.mxu0 0
      %747 = vmatmul.mubr.bf16.gmra.mxu0 %v709
      %v748 = vpop.f32.mrf.mxu0
      %v749 = vadd.f32 %v680, %v748
      %v750 = vpop.f32.mrf.mxu0
      %v751 = vadd.f32 %v682, %v750
      %v752 = vpop.f32.mrf.mxu0
      %v753 = vadd.f32 %v684, %v752
      %v754 = vpop.f32.mrf.mxu0
      %v755 = vadd.f32 %v686, %v754
      %756 = vmatprep.mubr.bf16.mxu0 0
      %757 = vmatmul.mubr.bf16.gmra.mxu0 %v712
      %v758 = vpop.f32.mrf.mxu0
      %v759 = vadd.f32 %v690, %v758
      %v760 = vpop.f32.mrf.mxu0
      %v761 = vadd.f32 %v692, %v760
      %v762 = vpop.f32.mrf.mxu0
      %v763 = vadd.f32 %v694, %v762
      %v764 = vpop.f32.mrf.mxu0
      %v765 = vadd.f32 %v696, %v764
      %766 = vdwg.mxu0
      %767 = vrot.lane.b32.xlu0 %v503, 15
      %v768 = vpop.permute.xlu0 %767
      %769 = vrot.lane.b32.xlu0 %v507, 15
      %v770 = vpop.permute.xlu0 %769
      %771 = vrot.lane.b32.xlu0 %v511, 15
      %v772 = vpop.permute.xlu0 %771
      %773 = vrot.lane.b32.xlu0 %v515, 15
      %v774 = vpop.permute.xlu0 %773
      %775 = vrot.lane.b32.xlu0 %v505, 15
      %v776 = vpop.permute.xlu0 %775
      %777 = vrot.lane.b32.xlu0 %v509, 15
      %v778 = vpop.permute.xlu0 %777
      %779 = vrot.lane.b32.xlu0 %v513, 15
      %v780 = vpop.permute.xlu0 %779
      %781 = vrot.lane.b32.xlu0 %v517, 15
      %v782 = vpop.permute.xlu0 %781
      %vm783 = vcmp.lt.s32.totalorder %v535, 15
      %v784 = vsel %vm783, %v768, %v776
      %v785 = vsel %vm783, %v770, %v778
      %v786 = vsel %vm783, %v772, %v780
      %v787 = vsel %vm783, %v774, %v782
      %v788 = vsel %vm783, %v776, %v768
      %v789 = vsel %vm783, %v778, %v770
      %v790 = vsel %vm783, %v780, %v772
      %v791 = vsel %vm783, %v782, %v774
      %s792 = scalar_lea.vmem %s2, 2
      %v793 = vld [vmem:[%s792] ss:$8 sm:$0x3]
      %v795 = vlaneseq
      %v796 = vshrl.u32 %v795, 7
      %v797 = vsub.s32 0, %v796
      %v798 = vrot.slane %v793, %v797
      %v799 = vlaneseq
      %v800 = vshrl.u32 %v799, 7
      %v801 = vsub.s32 1, %v800
      %v802 = vrot.slane %v793, %v801
      %v805 = vmul.f32 %v788, %v798
      %v806 = vmul.f32 %v784, %v802
      %v807 = vmul.f32 %v789, %v798
      %v808 = vmul.f32 %v785, %v802
      %v809 = vmul.f32 %v790, %v798
      %v810 = vmul.f32 %v786, %v802
      %v811 = vmul.f32 %v791, %v798
      %v812 = vmul.f32 %v787, %v802
      %s813 = scalar_lea.vmem %s5, 32
      %v814 = vld [vmem:[%s813] sm:$0xf]
      %v815 = vld [vmem:[%s813 + $0x4] sm:$0xf]
      %v816 = vld [vmem:[%s813 + $0x8] sm:$0xf]
      %v817 = vld [vmem:[%s813 + $0xc] sm:$0xf]
      %v818 = vpack.c.bf16 %v807, %v805
      %v819 = vpack.c.bf16 %v808, %v806
      %v820 = vpack.c.bf16 %v811, %v809
      %v821 = vpack.c.bf16 %v812, %v810
      %v826 = vunpack.c.l.b16 %v814
      %v827 = vunpack.c.l.b16 %v815
      %v828 = vunpack.c.l.b16 %v816
      %v829 = vunpack.c.l.b16 %v817
      %v830 = vpack.c.b16 %v827, %v826
      %v831 = vpack.c.b16 %v829, %v828
      %v833 = vsel %vm638, %v830, 0
      %v836 = vsel %vm638, %v831, 0
      %838 = vmatprep.subr.bf16.mxu0 0
      %839 = vmatpush1.bf16.msra.mxu0 0
      %840 = vmatprep.subr.bf16.mxu0 0
      %841 = vmatpush1.bf16.msra.mxu0 0
      %842 = vmatprep.subr.bf16.mxu0 0
      %843 = vmatpush1.bf16.msra.mxu0 0
      %844 = vmatprep.subr.bf16.mxu0 0
      %845 = vmatpush1.bf16.msra.mxu0 0
      %846 = vmatprep.subr.bf16.mxu0 0
      %847 = vmatpush1.bf16.msra.mxu0 0
      %848 = vmatprep.subr.bf16.mxu0 0
      %849 = vmatpush1.bf16.msra.mxu0 0
      %850 = vmatprep.subr.bf16.mxu0 %v821
      %851 = vmatpush1.bf16.msra.mxu0 %v820
      %852 = vmatprep.subr.bf16.mxu0 %v819
      %853 = vmatpush1.bf16.msra.mxu0 %v818
      %854 = vmatprep.subr.bf16.mxu0 0
      %855 = vmatpush2.bf16.msra.mxu0 0
      %856 = vmatprep.subr.bf16.mxu0 0
      %857 = vmatpush2.bf16.msra.mxu0 0
      %858 = vmatprep.subr.bf16.mxu0 0
      %859 = vmatpush2.bf16.msra.mxu0 0
      %860 = vmatprep.subr.bf16.mxu0 0
      %861 = vmatpush2.bf16.msra.mxu0 0
      %862 = vmatprep.subr.bf16.mxu0 0
      %863 = vmatpush2.bf16.msra.mxu0 0
      %864 = vmatprep.subr.bf16.mxu0 0
      %865 = vmatpush2.bf16.msra.mxu0 0
      %866 = vmatprep.subr.bf16.mxu0 0
      %867 = vmatpush2.bf16.msra.mxu0 0
      %868 = vmatprep.subr.bf16.mxu0 0
      %869 = vmatpush2.bf16.msra.mxu0 0
      %870 = vmatprep.mubr.bf16.mxu0 0
      %871 = vmatmul.mubr.bf16.gmra.mxu0 %v833
      %v872 = vpop.f32.mrf.mxu0
      %v873 = vadd.f32 0.0, %v872
      %v874 = vpop.f32.mrf.mxu0
      %v875 = vadd.f32 0.0, %v874
      %v876 = vpop.f32.mrf.mxu0
      %v877 = vadd.f32 0.0, %v876
      %v878 = vpop.f32.mrf.mxu0
      %v879 = vadd.f32 0.0, %v878
      %880 = vmatprep.mubr.bf16.mxu0 0
      %881 = vmatmul.mubr.bf16.gmra.mxu0 %v836
      %v882 = vpop.f32.mrf.mxu0
      %v883 = vadd.f32 0.0, %v882
      %v884 = vpop.f32.mrf.mxu0
      %v885 = vadd.f32 0.0, %v884
      %v886 = vpop.f32.mrf.mxu0
      %v887 = vadd.f32 0.0, %v886
      %v888 = vpop.f32.mrf.mxu0
      %v889 = vadd.f32 0.0, %v888
      %890 = vdwg.mxu0
      %v891 = vadd.f32 %v749, %v873
      %v892 = vadd.f32 %v751, %v875
      %v893 = vadd.f32 %v753, %v877
      %v894 = vadd.f32 %v755, %v879
      %v895 = vadd.f32 %v759, %v883
      %v896 = vadd.f32 %v761, %v885
      %v897 = vadd.f32 %v763, %v887
      %v898 = vadd.f32 %v765, %v889
      %899 = vrot.lane.b32.xlu0 %v503, 1
      %v900 = vpop.permute.xlu0 %899
      %901 = vrot.lane.b32.xlu0 %v507, 1
      %v902 = vpop.permute.xlu0 %901
      %903 = vrot.lane.b32.xlu0 %v511, 1
      %v904 = vpop.permute.xlu0 %903
      %905 = vrot.lane.b32.xlu0 %v515, 1
      %v906 = vpop.permute.xlu0 %905
      %907 = vrot.lane.b32.xlu0 %v505, 1
      %v908 = vpop.permute.xlu0 %907
      %909 = vrot.lane.b32.xlu0 %v509, 1
      %v910 = vpop.permute.xlu0 %909
      %911 = vrot.lane.b32.xlu0 %v513, 1
      %v912 = vpop.permute.xlu0 %911
      %913 = vrot.lane.b32.xlu0 %v517, 1
      %v914 = vpop.permute.xlu0 %913
      %vm915 = vcmp.lt.s32.totalorder %v535, 1
      %v916 = vsel %vm915, %v900, %v908
      %v917 = vsel %vm915, %v902, %v910
      %v918 = vsel %vm915, %v904, %v912
      %v919 = vsel %vm915, %v906, %v914
      %v920 = vsel %vm915, %v908, %v900
      %v921 = vsel %vm915, %v910, %v902
      %v922 = vsel %vm915, %v912, %v904
      %v923 = vsel %vm915, %v914, %v906
      %s924 = scalar_lea.vmem %s2, 3
      %v925 = vld [vmem:[%s924] ss:$8 sm:$0x3]
      %v927 = vlaneseq
      %v928 = vshrl.u32 %v927, 7
      %v929 = vsub.s32 0, %v928
      %v930 = vrot.slane %v925, %v929
      %v931 = vlaneseq
      %v932 = vshrl.u32 %v931, 7
      %v933 = vsub.s32 1, %v932
      %v934 = vrot.slane %v925, %v933
      %v937 = vmul.f32 %v920, %v930
      %v938 = vmul.f32 %v916, %v934
      %v939 = vmul.f32 %v921, %v930
      %v940 = vmul.f32 %v917, %v934
      %v941 = vmul.f32 %v922, %v930
      %v942 = vmul.f32 %v918, %v934
      %v943 = vmul.f32 %v923, %v930
      %v944 = vmul.f32 %v919, %v934
      %s945 = scalar_lea.vmem %s5, 48
      %v946 = vld [vmem:[%s945] sm:$0xf]
      %v947 = vld [vmem:[%s945 + $0x4] sm:$0xf]
      %v948 = vld [vmem:[%s945 + $0x8] sm:$0xf]
      %v949 = vld [vmem:[%s945 + $0xc] sm:$0xf]
      %v950 = vpack.c.bf16 %v939, %v937
      %v951 = vpack.c.bf16 %v940, %v938
      %v952 = vpack.c.bf16 %v943, %v941
      %v953 = vpack.c.bf16 %v944, %v942
      %v958 = vunpack.c.l.b16 %v946
      %v959 = vunpack.c.l.b16 %v947
      %v960 = vunpack.c.l.b16 %v948
      %v961 = vunpack.c.l.b16 %v949
      %v962 = vpack.c.b16 %v959, %v958
      %v963 = vpack.c.b16 %v961, %v960
      %v965 = vsel %vm638, %v962, 0
      %v968 = vsel %vm638, %v963, 0
      %970 = vmatprep.subr.bf16.mxu0 0
      %971 = vmatpush1.bf16.msra.mxu0 0
      %972 = vmatprep.subr.bf16.mxu0 0
      %973 = vmatpush1.bf16.msra.mxu0 0
      %974 = vmatprep.subr.bf16.mxu0 0
      %975 = vmatpush1.bf16.msra.mxu0 0
      %976 = vmatprep.subr.bf16.mxu0 0
      %977 = vmatpush1.bf16.msra.mxu0 0
      %978 = vmatprep.subr.bf16.mxu0 0
      %979 = vmatpush1.bf16.msra.mxu0 0
      %980 = vmatprep.subr.bf16.mxu0 0
      %981 = vmatpush1.bf16.msra.mxu0 0
      %982 = vmatprep.subr.bf16.mxu0 %v953
      %983 = vmatpush1.bf16.msra.mxu0 %v952
      %984 = vmatprep.subr.bf16.mxu0 %v951
      %985 = vmatpush1.bf16.msra.mxu0 %v950
      %986 = vmatprep.subr.bf16.mxu0 0
      %987 = vmatpush2.bf16.msra.mxu0 0
      %988 = vmatprep.subr.bf16.mxu0 0
      %989 = vmatpush2.bf16.msra.mxu0 0
      %990 = vmatprep.subr.bf16.mxu0 0
      %991 = vmatpush2.bf16.msra.mxu0 0
      %992 = vmatprep.subr.bf16.mxu0 0
      %993 = vmatpush2.bf16.msra.mxu0 0
      %994 = vmatprep.subr.bf16.mxu0 0
      %995 = vmatpush2.bf16.msra.mxu0 0
      %996 = vmatprep.subr.bf16.mxu0 0
      %997 = vmatpush2.bf16.msra.mxu0 0
      %998 = vmatprep.subr.bf16.mxu0 0
      %999 = vmatpush2.bf16.msra.mxu0 0
      %1000 = vmatprep.subr.bf16.mxu0 0
      %1001 = vmatpush2.bf16.msra.mxu0 0
      %1002 = vmatprep.mubr.bf16.mxu0 0
      %1003 = vmatmul.mubr.bf16.gmra.mxu0 %v965
      %v1004 = vpop.f32.mrf.mxu0
      %v1005 = vadd.f32 0.0, %v1004
      %v1006 = vpop.f32.mrf.mxu0
      %v1007 = vadd.f32 0.0, %v1006
      %v1008 = vpop.f32.mrf.mxu0
      %v1009 = vadd.f32 0.0, %v1008
      %v1010 = vpop.f32.mrf.mxu0
      %v1011 = vadd.f32 0.0, %v1010
      %1012 = vmatprep.mubr.bf16.mxu0 0
      %1013 = vmatmul.mubr.bf16.gmra.mxu0 %v968
      %v1014 = vpop.f32.mrf.mxu0
      %v1015 = vadd.f32 0.0, %v1014
      %v1016 = vpop.f32.mrf.mxu0
      %v1017 = vadd.f32 0.0, %v1016
      %v1018 = vpop.f32.mrf.mxu0
      %v1019 = vadd.f32 0.0, %v1018
      %v1020 = vpop.f32.mrf.mxu0
      %v1021 = vadd.f32 0.0, %v1020
      %1022 = vdwg.mxu0
      %v1023 = vadd.f32 %v891, %v1005
      %v1024 = vadd.f32 %v892, %v1007
      %v1025 = vadd.f32 %v893, %v1009
      %v1026 = vadd.f32 %v894, %v1011
      %v1027 = vadd.f32 %v895, %v1015
      %v1028 = vadd.f32 %v896, %v1017
      %v1029 = vadd.f32 %v897, %v1019
      %v1030 = vadd.f32 %v898, %v1021
      %s1031 = scalar_lea.vmem %s5, 64
      %v1032 = vld [vmem:[%s1031] sm:$0xf]
      %v1033 = vld [vmem:[%s1031 + $0x4] sm:$0xf]
      %v1034 = vld [vmem:[%s1031 + $0x8] sm:$0xf]
      %v1035 = vld [vmem:[%s1031 + $0xc] sm:$0xf]
      %v1036 = vpack.c.bf16 %v507, %v503
      %v1037 = vpack.c.bf16 %v509, %v505
      %v1038 = vpack.c.bf16 %v515, %v511
      %v1039 = vpack.c.bf16 %v517, %v513
      %v1044 = vunpack.c.l.b16 %v1032
      %v1045 = vunpack.c.l.b16 %v1033
      %v1046 = vunpack.c.l.b16 %v1034
      %v1047 = vunpack.c.l.b16 %v1035
      %v1048 = vpack.c.b16 %v1045, %v1044
      %v1049 = vpack.c.b16 %v1047, %v1046
      %v1051 = vsel %vm638, %v1048, 0
      %v1054 = vsel %vm638, %v1049, 0
      %1056 = vmatprep.subr.bf16.mxu0 0
      %1057 = vmatpush1.bf16.msra.mxu0 0
      %1058 = vmatprep.subr.bf16.mxu0 0
      %1059 = vmatpush1.bf16.msra.mxu0 0
      %1060 = vmatprep.subr.bf16.mxu0 0
      %1061 = vmatpush1.bf16.msra.mxu0 0
      %1062 = vmatprep.subr.bf16.mxu0 0
      %1063 = vmatpush1.bf16.msra.mxu0 0
      %1064 = vmatprep.subr.bf16.mxu0 0
      %1065 = vmatpush1.bf16.msra.mxu0 0
      %1066 = vmatprep.subr.bf16.mxu0 0
      %1067 = vmatpush1.bf16.msra.mxu0 0
      %1068 = vmatprep.subr.bf16.mxu0 %v1039
      %1069 = vmatpush1.bf16.msra.mxu0 %v1038
      %1070 = vmatprep.subr.bf16.mxu0 %v1037
      %1071 = vmatpush1.bf16.msra.mxu0 %v1036
      %1072 = vmatprep.subr.bf16.mxu0 0
      %1073 = vmatpush2.bf16.msra.mxu0 0
      %1074 = vmatprep.subr.bf16.mxu0 0
      %1075 = vmatpush2.bf16.msra.mxu0 0
      %1076 = vmatprep.subr.bf16.mxu0 0
      %1077 = vmatpush2.bf16.msra.mxu0 0
      %1078 = vmatprep.subr.bf16.mxu0 0
      %1079 = vmatpush2.bf16.msra.mxu0 0
      %1080 = vmatprep.subr.bf16.mxu0 0
      %1081 = vmatpush2.bf16.msra.mxu0 0
      %1082 = vmatprep.subr.bf16.mxu0 0
      %1083 = vmatpush2.bf16.msra.mxu0 0
      %1084 = vmatprep.subr.bf16.mxu0 0
      %1085 = vmatpush2.bf16.msra.mxu0 0
      %1086 = vmatprep.subr.bf16.mxu0 0
      %1087 = vmatpush2.bf16.msra.mxu0 0
      %1088 = vmatprep.mubr.bf16.mxu0 0
      %1089 = vmatmul.mubr.bf16.gmra.mxu0 %v1051
      %v1090 = vpop.f32.mrf.mxu0
      %v1091 = vadd.f32 0.0, %v1090
      %v1092 = vpop.f32.mrf.mxu0
      %v1093 = vadd.f32 0.0, %v1092
      %v1094 = vpop.f32.mrf.mxu0
      %v1095 = vadd.f32 0.0, %v1094
      %v1096 = vpop.f32.mrf.mxu0
      %v1097 = vadd.f32 0.0, %v1096
      %1098 = vmatprep.mubr.bf16.mxu0 0
      %1099 = vmatmul.mubr.bf16.gmra.mxu0 %v1054
      %v1100 = vpop.f32.mrf.mxu0
      %v1101 = vadd.f32 0.0, %v1100
      %v1102 = vpop.f32.mrf.mxu0
      %v1103 = vadd.f32 0.0, %v1102
      %v1104 = vpop.f32.mrf.mxu0
      %v1105 = vadd.f32 0.0, %v1104
      %v1106 = vpop.f32.mrf.mxu0
      %v1107 = vadd.f32 0.0, %v1106
      %1108 = vdwg.mxu0
      %v1109 = vadd.f32 %v1023, %v1091
      %v1110 = vadd.f32 %v1024, %v1093
      %v1111 = vadd.f32 %v1025, %v1095
      %v1112 = vadd.f32 %v1026, %v1097
      %v1113 = vadd.f32 %v1027, %v1101
      %v1114 = vadd.f32 %v1028, %v1103
      %v1115 = vadd.f32 %v1029, %v1105
      %v1116 = vadd.f32 %v1030, %v1107
      %1117 = vrot.lane.b32.xlu0 %v503, 127
      %v1118 = vpop.permute.xlu0 %1117
      %1119 = vrot.lane.b32.xlu0 %v507, 127
      %v1120 = vpop.permute.xlu0 %1119
      %1121 = vrot.lane.b32.xlu0 %v511, 127
      %v1122 = vpop.permute.xlu0 %1121
      %1123 = vrot.lane.b32.xlu0 %v515, 127
      %v1124 = vpop.permute.xlu0 %1123
      %1125 = vrot.lane.b32.xlu0 %v505, 127
      %v1126 = vpop.permute.xlu0 %1125
      %1127 = vrot.lane.b32.xlu0 %v509, 127
      %v1128 = vpop.permute.xlu0 %1127
      %1129 = vrot.lane.b32.xlu0 %v513, 127
      %v1130 = vpop.permute.xlu0 %1129
      %1131 = vrot.lane.b32.xlu0 %v517, 127
      %v1132 = vpop.permute.xlu0 %1131
      %vm1133 = vcmp.lt.s32.totalorder %v535, 127
      %v1134 = vsel %vm1133, %v1118, %v1126
      %v1135 = vsel %vm1133, %v1120, %v1128
      %v1136 = vsel %vm1133, %v1122, %v1130
      %v1137 = vsel %vm1133, %v1124, %v1132
      %v1138 = vsel %vm1133, %v1126, %v1118
      %v1139 = vsel %vm1133, %v1128, %v1120
      %v1140 = vsel %vm1133, %v1130, %v1122
      %v1141 = vsel %vm1133, %v1132, %v1124
      %s1142 = scalar_lea.vmem %s2, 5
      %v1143 = vld [vmem:[%s1142] ss:$8 sm:$0x3]
      %v1145 = vlaneseq
      %v1146 = vshrl.u32 %v1145, 7
      %v1147 = vsub.s32 0, %v1146
      %v1148 = vrot.slane %v1143, %v1147
      %v1149 = vlaneseq
      %v1150 = vshrl.u32 %v1149, 7
      %v1151 = vsub.s32 1, %v1150
      %v1152 = vrot.slane %v1143, %v1151
      %v1155 = vmul.f32 %v1134, %v1148
      %v1156 = vmul.f32 %v1138, %v1152
      %v1157 = vmul.f32 %v1135, %v1148
      %v1158 = vmul.f32 %v1139, %v1152
      %v1159 = vmul.f32 %v1136, %v1148
      %v1160 = vmul.f32 %v1140, %v1152
      %v1161 = vmul.f32 %v1137, %v1148
      %v1162 = vmul.f32 %v1141, %v1152
      %s1163 = scalar_lea.vmem %s5, 80
      %v1164 = vld [vmem:[%s1163] sm:$0xf]
      %v1165 = vld [vmem:[%s1163 + $0x4] sm:$0xf]
      %v1166 = vld [vmem:[%s1163 + $0x8] sm:$0xf]
      %v1167 = vld [vmem:[%s1163 + $0xc] sm:$0xf]
      %v1168 = vpack.c.bf16 %v1157, %v1155
      %v1169 = vpack.c.bf16 %v1158, %v1156
      %v1170 = vpack.c.bf16 %v1161, %v1159
      %v1171 = vpack.c.bf16 %v1162, %v1160
      %v1176 = vunpack.c.l.b16 %v1164
      %v1177 = vunpack.c.l.b16 %v1165
      %v1178 = vunpack.c.l.b16 %v1166
      %v1179 = vunpack.c.l.b16 %v1167
      %v1180 = vpack.c.b16 %v1177, %v1176
      %v1181 = vpack.c.b16 %v1179, %v1178
      %v1183 = vsel %vm638, %v1180, 0
      %v1186 = vsel %vm638, %v1181, 0
      %1188 = vmatprep.subr.bf16.mxu0 0
      %1189 = vmatpush1.bf16.msra.mxu0 0
      %1190 = vmatprep.subr.bf16.mxu0 0
      %1191 = vmatpush1.bf16.msra.mxu0 0
      %1192 = vmatprep.subr.bf16.mxu0 0
      %1193 = vmatpush1.bf16.msra.mxu0 0
      %1194 = vmatprep.subr.bf16.mxu0 0
      %1195 = vmatpush1.bf16.msra.mxu0 0
      %1196 = vmatprep.subr.bf16.mxu0 0
      %1197 = vmatpush1.bf16.msra.mxu0 0
      %1198 = vmatprep.subr.bf16.mxu0 0
      %1199 = vmatpush1.bf16.msra.mxu0 0
      %1200 = vmatprep.subr.bf16.mxu0 %v1171
      %1201 = vmatpush1.bf16.msra.mxu0 %v1170
      %1202 = vmatprep.subr.bf16.mxu0 %v1169
      %1203 = vmatpush1.bf16.msra.mxu0 %v1168
      %1204 = vmatprep.subr.bf16.mxu0 0
      %1205 = vmatpush2.bf16.msra.mxu0 0
      %1206 = vmatprep.subr.bf16.mxu0 0
      %1207 = vmatpush2.bf16.msra.mxu0 0
      %1208 = vmatprep.subr.bf16.mxu0 0
      %1209 = vmatpush2.bf16.msra.mxu0 0
      %1210 = vmatprep.subr.bf16.mxu0 0
      %1211 = vmatpush2.bf16.msra.mxu0 0
      %1212 = vmatprep.subr.bf16.mxu0 0
      %1213 = vmatpush2.bf16.msra.mxu0 0
      %1214 = vmatprep.subr.bf16.mxu0 0
      %1215 = vmatpush2.bf16.msra.mxu0 0
      %1216 = vmatprep.subr.bf16.mxu0 0
      %1217 = vmatpush2.bf16.msra.mxu0 0
      %1218 = vmatprep.subr.bf16.mxu0 0
      %1219 = vmatpush2.bf16.msra.mxu0 0
      %1220 = vmatprep.mubr.bf16.mxu0 0
      %1221 = vmatmul.mubr.bf16.gmra.mxu0 %v1183
      %v1222 = vpop.f32.mrf.mxu0
      %v1223 = vadd.f32 0.0, %v1222
      %v1224 = vpop.f32.mrf.mxu0
      %v1225 = vadd.f32 0.0, %v1224
      %v1226 = vpop.f32.mrf.mxu0
      %v1227 = vadd.f32 0.0, %v1226
      %v1228 = vpop.f32.mrf.mxu0
      %v1229 = vadd.f32 0.0, %v1228
      %1230 = vmatprep.mubr.bf16.mxu0 0
      %1231 = vmatmul.mubr.bf16.gmra.mxu0 %v1186
      %v1232 = vpop.f32.mrf.mxu0
      %v1233 = vadd.f32 0.0, %v1232
      %v1234 = vpop.f32.mrf.mxu0
      %v1235 = vadd.f32 0.0, %v1234
      %v1236 = vpop.f32.mrf.mxu0
      %v1237 = vadd.f32 0.0, %v1236
      %v1238 = vpop.f32.mrf.mxu0
      %v1239 = vadd.f32 0.0, %v1238
      %1240 = vdwg.mxu0
      %v1241 = vadd.f32 %v1109, %v1223
      %v1242 = vadd.f32 %v1110, %v1225
      %v1243 = vadd.f32 %v1111, %v1227
      %v1244 = vadd.f32 %v1112, %v1229
      %v1245 = vadd.f32 %v1113, %v1233
      %v1246 = vadd.f32 %v1114, %v1235
      %v1247 = vadd.f32 %v1115, %v1237
      %v1248 = vadd.f32 %v1116, %v1239
      %1249 = vrot.lane.b32.xlu0 %v503, 113
      %v1250 = vpop.permute.xlu0 %1249
      %1251 = vrot.lane.b32.xlu0 %v507, 113
      %v1252 = vpop.permute.xlu0 %1251
      %1253 = vrot.lane.b32.xlu0 %v511, 113
      %v1254 = vpop.permute.xlu0 %1253
      %1255 = vrot.lane.b32.xlu0 %v515, 113
      %v1256 = vpop.permute.xlu0 %1255
      %1257 = vrot.lane.b32.xlu0 %v505, 113
      %v1258 = vpop.permute.xlu0 %1257
      %1259 = vrot.lane.b32.xlu0 %v509, 113
      %v1260 = vpop.permute.xlu0 %1259
      %1261 = vrot.lane.b32.xlu0 %v513, 113
      %v1262 = vpop.permute.xlu0 %1261
      %1263 = vrot.lane.b32.xlu0 %v517, 113
      %v1264 = vpop.permute.xlu0 %1263
      %vm1265 = vcmp.lt.s32.totalorder %v535, 113
      %v1266 = vsel %vm1265, %v1250, %v1258
      %v1267 = vsel %vm1265, %v1252, %v1260
      %v1268 = vsel %vm1265, %v1254, %v1262
      %v1269 = vsel %vm1265, %v1256, %v1264
      %v1270 = vsel %vm1265, %v1258, %v1250
      %v1271 = vsel %vm1265, %v1260, %v1252
      %v1272 = vsel %vm1265, %v1262, %v1254
      %v1273 = vsel %vm1265, %v1264, %v1256
      %s1274 = scalar_lea.vmem %s2, 6
      %v1275 = vld [vmem:[%s1274] ss:$8 sm:$0x3]
      %v1277 = vlaneseq
      %v1278 = vshrl.u32 %v1277, 7
      %v1279 = vsub.s32 0, %v1278
      %v1280 = vrot.slane %v1275, %v1279
      %v1281 = vlaneseq
      %v1282 = vshrl.u32 %v1281, 7
      %v1283 = vsub.s32 1, %v1282
      %v1284 = vrot.slane %v1275, %v1283
      %v1287 = vmul.f32 %v1266, %v1280
      %v1288 = vmul.f32 %v1270, %v1284
      %v1289 = vmul.f32 %v1267, %v1280
      %v1290 = vmul.f32 %v1271, %v1284
      %v1291 = vmul.f32 %v1268, %v1280
      %v1292 = vmul.f32 %v1272, %v1284
      %v1293 = vmul.f32 %v1269, %v1280
      %v1294 = vmul.f32 %v1273, %v1284
      %s1295 = scalar_lea.vmem %s5, 96
      %v1296 = vld [vmem:[%s1295] sm:$0xf]
      %v1297 = vld [vmem:[%s1295 + $0x4] sm:$0xf]
      %v1298 = vld [vmem:[%s1295 + $0x8] sm:$0xf]
      %v1299 = vld [vmem:[%s1295 + $0xc] sm:$0xf]
      %v1300 = vpack.c.bf16 %v1289, %v1287
      %v1301 = vpack.c.bf16 %v1290, %v1288
      %v1302 = vpack.c.bf16 %v1293, %v1291
      %v1303 = vpack.c.bf16 %v1294, %v1292
      %v1308 = vunpack.c.l.b16 %v1296
      %v1309 = vunpack.c.l.b16 %v1297
      %v1310 = vunpack.c.l.b16 %v1298
      %v1311 = vunpack.c.l.b16 %v1299
      %v1312 = vpack.c.b16 %v1309, %v1308
      %v1313 = vpack.c.b16 %v1311, %v1310
      %v1315 = vsel %vm638, %v1312, 0
      %v1318 = vsel %vm638, %v1313, 0
      %1320 = vmatprep.subr.bf16.mxu0 0
      %1321 = vmatpush1.bf16.msra.mxu0 0
      %1322 = vmatprep.subr.bf16.mxu0 0
      %1323 = vmatpush1.bf16.msra.mxu0 0
      %1324 = vmatprep.subr.bf16.mxu0 0
      %1325 = vmatpush1.bf16.msra.mxu0 0
      %1326 = vmatprep.subr.bf16.mxu0 0
      %1327 = vmatpush1.bf16.msra.mxu0 0
      %1328 = vmatprep.subr.bf16.mxu0 0
      %1329 = vmatpush1.bf16.msra.mxu0 0
      %1330 = vmatprep.subr.bf16.mxu0 0
      %1331 = vmatpush1.bf16.msra.mxu0 0
      %1332 = vmatprep.subr.bf16.mxu0 %v1303
      %1333 = vmatpush1.bf16.msra.mxu0 %v1302
      %1334 = vmatprep.subr.bf16.mxu0 %v1301
      %1335 = vmatpush1.bf16.msra.mxu0 %v1300
      %1336 = vmatprep.subr.bf16.mxu0 0
      %1337 = vmatpush2.bf16.msra.mxu0 0
      %1338 = vmatprep.subr.bf16.mxu0 0
      %1339 = vmatpush2.bf16.msra.mxu0 0
      %1340 = vmatprep.subr.bf16.mxu0 0
      %1341 = vmatpush2.bf16.msra.mxu0 0
      %1342 = vmatprep.subr.bf16.mxu0 0
      %1343 = vmatpush2.bf16.msra.mxu0 0
      %1344 = vmatprep.subr.bf16.mxu0 0
      %1345 = vmatpush2.bf16.msra.mxu0 0
      %1346 = vmatprep.subr.bf16.mxu0 0
      %1347 = vmatpush2.bf16.msra.mxu0 0
      %1348 = vmatprep.subr.bf16.mxu0 0
      %1349 = vmatpush2.bf16.msra.mxu0 0
      %1350 = vmatprep.subr.bf16.mxu0 0
      %1351 = vmatpush2.bf16.msra.mxu0 0
      %1352 = vmatprep.mubr.bf16.mxu0 0
      %1353 = vmatmul.mubr.bf16.gmra.mxu0 %v1315
      %v1354 = vpop.f32.mrf.mxu0
      %v1355 = vadd.f32 0.0, %v1354
      %v1356 = vpop.f32.mrf.mxu0
      %v1357 = vadd.f32 0.0, %v1356
      %v1358 = vpop.f32.mrf.mxu0
      %v1359 = vadd.f32 0.0, %v1358
      %v1360 = vpop.f32.mrf.mxu0
      %v1361 = vadd.f32 0.0, %v1360
      %1362 = vmatprep.mubr.bf16.mxu0 0
      %1363 = vmatmul.mubr.bf16.gmra.mxu0 %v1318
      %v1364 = vpop.f32.mrf.mxu0
      %v1365 = vadd.f32 0.0, %v1364
      %v1366 = vpop.f32.mrf.mxu0
      %v1367 = vadd.f32 0.0, %v1366
      %v1368 = vpop.f32.mrf.mxu0
      %v1369 = vadd.f32 0.0, %v1368
      %v1370 = vpop.f32.mrf.mxu0
      %v1371 = vadd.f32 0.0, %v1370
      %1372 = vdwg.mxu0
      %v1373 = vadd.f32 %v1241, %v1355
      %v1374 = vadd.f32 %v1242, %v1357
      %v1375 = vadd.f32 %v1243, %v1359
      %v1376 = vadd.f32 %v1244, %v1361
      %v1377 = vadd.f32 %v1245, %v1365
      %v1378 = vadd.f32 %v1246, %v1367
      %v1379 = vadd.f32 %v1247, %v1369
      %v1380 = vadd.f32 %v1248, %v1371
      %1381 = vrot.lane.b32.xlu0 %v503, 112
      %v1382 = vpop.permute.xlu0 %1381
      %1383 = vrot.lane.b32.xlu0 %v507, 112
      %v1384 = vpop.permute.xlu0 %1383
      %1385 = vrot.lane.b32.xlu0 %v511, 112
      %v1386 = vpop.permute.xlu0 %1385
      %1387 = vrot.lane.b32.xlu0 %v515, 112
      %v1388 = vpop.permute.xlu0 %1387
      %1389 = vrot.lane.b32.xlu0 %v505, 112
      %v1390 = vpop.permute.xlu0 %1389
      %1391 = vrot.lane.b32.xlu0 %v509, 112
      %v1392 = vpop.permute.xlu0 %1391
      %1393 = vrot.lane.b32.xlu0 %v513, 112
      %v1394 = vpop.permute.xlu0 %1393
      %1395 = vrot.lane.b32.xlu0 %v517, 112
      %v1396 = vpop.permute.xlu0 %1395
      %vm1397 = vcmp.lt.s32.totalorder %v535, 112
      %v1398 = vsel %vm1397, %v1382, %v1390
      %v1399 = vsel %vm1397, %v1384, %v1392
      %v1400 = vsel %vm1397, %v1386, %v1394
      %v1401 = vsel %vm1397, %v1388, %v1396
      %v1402 = vsel %vm1397, %v1390, %v1382
      %v1403 = vsel %vm1397, %v1392, %v1384
      %v1404 = vsel %vm1397, %v1394, %v1386
      %v1405 = vsel %vm1397, %v1396, %v1388
      %s1406 = scalar_lea.vmem %s2, 7
      %v1407 = vld [vmem:[%s1406] ss:$8 sm:$0x3]
      %v1409 = vlaneseq
      %v1410 = vshrl.u32 %v1409, 7
      %v1411 = vsub.s32 0, %v1410
      %v1412 = vrot.slane %v1407, %v1411
      %v1413 = vlaneseq
      %v1414 = vshrl.u32 %v1413, 7
      %v1415 = vsub.s32 1, %v1414
      %v1416 = vrot.slane %v1407, %v1415
      %v1419 = vmul.f32 %v1398, %v1412
      %v1420 = vmul.f32 %v1402, %v1416
      %v1421 = vmul.f32 %v1399, %v1412
      %v1422 = vmul.f32 %v1403, %v1416
      %v1423 = vmul.f32 %v1400, %v1412
      %v1424 = vmul.f32 %v1404, %v1416
      %v1425 = vmul.f32 %v1401, %v1412
      %v1426 = vmul.f32 %v1405, %v1416
      %s1427 = scalar_lea.vmem %s5, 112
      %v1428 = vld [vmem:[%s1427] sm:$0xf]
      %v1429 = vld [vmem:[%s1427 + $0x4] sm:$0xf]
      %v1430 = vld [vmem:[%s1427 + $0x8] sm:$0xf]
      %v1431 = vld [vmem:[%s1427 + $0xc] sm:$0xf]
      %v1432 = vpack.c.bf16 %v1421, %v1419
      %v1433 = vpack.c.bf16 %v1422, %v1420
      %v1434 = vpack.c.bf16 %v1425, %v1423
      %v1435 = vpack.c.bf16 %v1426, %v1424
      %v1440 = vunpack.c.l.b16 %v1428
      %v1441 = vunpack.c.l.b16 %v1429
      %v1442 = vunpack.c.l.b16 %v1430
      %v1443 = vunpack.c.l.b16 %v1431
      %v1444 = vpack.c.b16 %v1441, %v1440
      %v1445 = vpack.c.b16 %v1443, %v1442
      %v1447 = vsel %vm638, %v1444, 0
      %v1450 = vsel %vm638, %v1445, 0
      %1452 = vmatprep.subr.bf16.mxu0 0
      %1453 = vmatpush1.bf16.msra.mxu0 0
      %1454 = vmatprep.subr.bf16.mxu0 0
      %1455 = vmatpush1.bf16.msra.mxu0 0
      %1456 = vmatprep.subr.bf16.mxu0 0
      %1457 = vmatpush1.bf16.msra.mxu0 0
      %1458 = vmatprep.subr.bf16.mxu0 0
      %1459 = vmatpush1.bf16.msra.mxu0 0
      %1460 = vmatprep.subr.bf16.mxu0 0
      %1461 = vmatpush1.bf16.msra.mxu0 0
      %1462 = vmatprep.subr.bf16.mxu0 0
      %1463 = vmatpush1.bf16.msra.mxu0 0
      %1464 = vmatprep.subr.bf16.mxu0 %v1435
      %1465 = vmatpush1.bf16.msra.mxu0 %v1434
      %1466 = vmatprep.subr.bf16.mxu0 %v1433
      %1467 = vmatpush1.bf16.msra.mxu0 %v1432
      %1468 = vmatprep.subr.bf16.mxu0 0
      %1469 = vmatpush2.bf16.msra.mxu0 0
      %1470 = vmatprep.subr.bf16.mxu0 0
      %1471 = vmatpush2.bf16.msra.mxu0 0
      %1472 = vmatprep.subr.bf16.mxu0 0
      %1473 = vmatpush2.bf16.msra.mxu0 0
      %1474 = vmatprep.subr.bf16.mxu0 0
      %1475 = vmatpush2.bf16.msra.mxu0 0
      %1476 = vmatprep.subr.bf16.mxu0 0
      %1477 = vmatpush2.bf16.msra.mxu0 0
      %1478 = vmatprep.subr.bf16.mxu0 0
      %1479 = vmatpush2.bf16.msra.mxu0 0
      %1480 = vmatprep.subr.bf16.mxu0 0
      %1481 = vmatpush2.bf16.msra.mxu0 0
      %1482 = vmatprep.subr.bf16.mxu0 0
      %1483 = vmatpush2.bf16.msra.mxu0 0
      %1484 = vmatprep.mubr.bf16.mxu0 0
      %1485 = vmatmul.mubr.bf16.gmra.mxu0 %v1447
      %v1486 = vpop.f32.mrf.mxu0
      %v1487 = vadd.f32 0.0, %v1486
      %v1488 = vpop.f32.mrf.mxu0
      %v1489 = vadd.f32 0.0, %v1488
      %v1490 = vpop.f32.mrf.mxu0
      %v1491 = vadd.f32 0.0, %v1490
      %v1492 = vpop.f32.mrf.mxu0
      %v1493 = vadd.f32 0.0, %v1492
      %1494 = vmatprep.mubr.bf16.mxu0 0
      %1495 = vmatmul.mubr.bf16.gmra.mxu0 %v1450
      %v1496 = vpop.f32.mrf.mxu0
      %v1497 = vadd.f32 0.0, %v1496
      %v1498 = vpop.f32.mrf.mxu0
      %v1499 = vadd.f32 0.0, %v1498
      %v1500 = vpop.f32.mrf.mxu0
      %v1501 = vadd.f32 0.0, %v1500
      %v1502 = vpop.f32.mrf.mxu0
      %v1503 = vadd.f32 0.0, %v1502
      %1504 = vdwg.mxu0
      %v1505 = vadd.f32 %v1373, %v1487
      %v1506 = vadd.f32 %v1374, %v1489
      %v1507 = vadd.f32 %v1375, %v1491
      %v1508 = vadd.f32 %v1376, %v1493
      %v1509 = vadd.f32 %v1377, %v1497
      %v1510 = vadd.f32 %v1378, %v1499
      %v1511 = vadd.f32 %v1379, %v1501
      %v1512 = vadd.f32 %v1380, %v1503
      %1513 = vrot.lane.b32.xlu0 %v503, 111
      %v1514 = vpop.permute.xlu0 %1513
      %1515 = vrot.lane.b32.xlu0 %v507, 111
      %v1516 = vpop.permute.xlu0 %1515
      %1517 = vrot.lane.b32.xlu0 %v511, 111
      %v1518 = vpop.permute.xlu0 %1517
      %1519 = vrot.lane.b32.xlu0 %v515, 111
      %v1520 = vpop.permute.xlu0 %1519
      %1521 = vrot.lane.b32.xlu0 %v505, 111
      %v1522 = vpop.permute.xlu0 %1521
      %1523 = vrot.lane.b32.xlu0 %v509, 111
      %v1524 = vpop.permute.xlu0 %1523
      %1525 = vrot.lane.b32.xlu0 %v513, 111
      %v1526 = vpop.permute.xlu0 %1525
      %1527 = vrot.lane.b32.xlu0 %v517, 111
      %v1528 = vpop.permute.xlu0 %1527
      %vm1529 = vcmp.lt.s32.totalorder %v535, 111
      %v1530 = vsel %vm1529, %v1514, %v1522
      %v1531 = vsel %vm1529, %v1516, %v1524
      %v1532 = vsel %vm1529, %v1518, %v1526
      %v1533 = vsel %vm1529, %v1520, %v1528
      %v1534 = vsel %vm1529, %v1522, %v1514
      %v1535 = vsel %vm1529, %v1524, %v1516
      %v1536 = vsel %vm1529, %v1526, %v1518
      %v1537 = vsel %vm1529, %v1528, %v1520
      %s1538 = scalar_lea.vmem %s2, 16
      %v1539 = vld [vmem:[%s1538] ss:$8 sm:$0x3]
      %v1541 = vlaneseq
      %v1542 = vshrl.u32 %v1541, 7
      %v1543 = vsub.s32 0, %v1542
      %v1544 = vrot.slane %v1539, %v1543
      %v1545 = vlaneseq
      %v1546 = vshrl.u32 %v1545, 7
      %v1547 = vsub.s32 1, %v1546
      %v1548 = vrot.slane %v1539, %v1547
      %v1551 = vmul.f32 %v1530, %v1544
      %v1552 = vmul.f32 %v1534, %v1548
      %v1553 = vmul.f32 %v1531, %v1544
      %v1554 = vmul.f32 %v1535, %v1548
      %v1555 = vmul.f32 %v1532, %v1544
      %v1556 = vmul.f32 %v1536, %v1548
      %v1557 = vmul.f32 %v1533, %v1544
      %v1558 = vmul.f32 %v1537, %v1548
      %s1559 = scalar_lea.vmem %s5, 128
      %v1560 = vld [vmem:[%s1559] sm:$0xf]
      %v1561 = vld [vmem:[%s1559 + $0x4] sm:$0xf]
      %v1562 = vld [vmem:[%s1559 + $0x8] sm:$0xf]
      %v1563 = vld [vmem:[%s1559 + $0xc] sm:$0xf]
      %v1564 = vpack.c.bf16 %v1553, %v1551
      %v1565 = vpack.c.bf16 %v1554, %v1552
      %v1566 = vpack.c.bf16 %v1557, %v1555
      %v1567 = vpack.c.bf16 %v1558, %v1556
      %v1572 = vunpack.c.l.b16 %v1560
      %v1573 = vunpack.c.l.b16 %v1561
      %v1574 = vunpack.c.l.b16 %v1562
      %v1575 = vunpack.c.l.b16 %v1563
      %v1576 = vpack.c.b16 %v1573, %v1572
      %v1577 = vpack.c.b16 %v1575, %v1574
      %v1579 = vsel %vm638, %v1576, 0
      %v1582 = vsel %vm638, %v1577, 0
      %1584 = vmatprep.subr.bf16.mxu0 0
      %1585 = vmatpush1.bf16.msra.mxu0 0
      %1586 = vmatprep.subr.bf16.mxu0 0
      %1587 = vmatpush1.bf16.msra.mxu0 0
      %1588 = vmatprep.subr.bf16.mxu0 0
      %1589 = vmatpush1.bf16.msra.mxu0 0
      %1590 = vmatprep.subr.bf16.mxu0 0
      %1591 = vmatpush1.bf16.msra.mxu0 0
      %1592 = vmatprep.subr.bf16.mxu0 0
      %1593 = vmatpush1.bf16.msra.mxu0 0
      %1594 = vmatprep.subr.bf16.mxu0 0
      %1595 = vmatpush1.bf16.msra.mxu0 0
      %1596 = vmatprep.subr.bf16.mxu0 %v1567
      %1597 = vmatpush1.bf16.msra.mxu0 %v1566
      %1598 = vmatprep.subr.bf16.mxu0 %v1565
      %1599 = vmatpush1.bf16.msra.mxu0 %v1564
      %1600 = vmatprep.subr.bf16.mxu0 0
      %1601 = vmatpush2.bf16.msra.mxu0 0
      %1602 = vmatprep.subr.bf16.mxu0 0
      %1603 = vmatpush2.bf16.msra.mxu0 0
      %1604 = vmatprep.subr.bf16.mxu0 0
      %1605 = vmatpush2.bf16.msra.mxu0 0
      %1606 = vmatprep.subr.bf16.mxu0 0
      %1607 = vmatpush2.bf16.msra.mxu0 0
      %1608 = vmatprep.subr.bf16.mxu0 0
      %1609 = vmatpush2.bf16.msra.mxu0 0
      %1610 = vmatprep.subr.bf16.mxu0 0
      %1611 = vmatpush2.bf16.msra.mxu0 0
      %1612 = vmatprep.subr.bf16.mxu0 0
      %1613 = vmatpush2.bf16.msra.mxu0 0
      %1614 = vmatprep.subr.bf16.mxu0 0
      %1615 = vmatpush2.bf16.msra.mxu0 0
      %1616 = vmatprep.mubr.bf16.mxu0 0
      %1617 = vmatmul.mubr.bf16.gmra.mxu0 %v1579
      %v1618 = vpop.f32.mrf.mxu0
      %v1619 = vadd.f32 0.0, %v1618
      %v1620 = vpop.f32.mrf.mxu0
      %v1621 = vadd.f32 0.0, %v1620
      %v1622 = vpop.f32.mrf.mxu0
      %v1623 = vadd.f32 0.0, %v1622
      %v1624 = vpop.f32.mrf.mxu0
      %v1625 = vadd.f32 0.0, %v1624
      %1626 = vmatprep.mubr.bf16.mxu0 0
      %1627 = vmatmul.mubr.bf16.gmra.mxu0 %v1582
      %v1628 = vpop.f32.mrf.mxu0
      %v1629 = vadd.f32 0.0, %v1628
      %v1630 = vpop.f32.mrf.mxu0
      %v1631 = vadd.f32 0.0, %v1630
      %v1632 = vpop.f32.mrf.mxu0
      %v1633 = vadd.f32 0.0, %v1632
      %v1634 = vpop.f32.mrf.mxu0
      %v1635 = vadd.f32 0.0, %v1634
      %1636 = vdwg.mxu0
      %v1637 = vadd.f32 %v1505, %v1619
      %v1638 = vadd.f32 %v1506, %v1621
      %v1639 = vadd.f32 %v1507, %v1623
      %v1640 = vadd.f32 %v1508, %v1625
      %v1641 = vadd.f32 %v1509, %v1629
      %v1642 = vadd.f32 %v1510, %v1631
      %v1643 = vadd.f32 %v1511, %v1633
      %v1644 = vadd.f32 %v1512, %v1635
      %v1645 = vld [vmem:[%s6] sm:$0xff]
      %v1646 = vld [vmem:[%s6 + $0x8] sm:$0xff]
      %v1647 = vld [vmem:[%s6 + $0x10] sm:$0xff]
      %v1648 = vld [vmem:[%s6 + $0x18] sm:$0xff]
      %1650 = vset.pattern.permute.xlu0 0
      %1651 = vperm.xlu0 %1650, %v1645
      %v1652 = vpop.permute.xlu0 %1651
      %1655 = vset.pattern.permute.xlu0 0
      %1656 = vperm.xlu0 %1655, %v1646
      %v1657 = vpop.permute.xlu0 %1656
      %1660 = vset.pattern.permute.xlu0 0
      %1661 = vperm.xlu0 %1660, %v1647
      %v1662 = vpop.permute.xlu0 %1661
      %1665 = vset.pattern.permute.xlu0 0
      %1666 = vperm.xlu0 %1665, %v1648
      %v1667 = vpop.permute.xlu0 %1666
      %v1669 = vadd.f32 %v1637, %v1652
      %v1670 = vadd.f32 %v1638, %v1652
      %v1671 = vadd.f32 %v1639, %v1657
      %v1672 = vadd.f32 %v1640, %v1657
      %v1673 = vadd.f32 %v1641, %v1662
      %v1674 = vadd.f32 %v1642, %v1662
      %v1675 = vadd.f32 %v1643, %v1667
      %v1676 = vadd.f32 %v1644, %v1667
      %v1677 = vmax.f32 %v1669, 0.0
      %v1678 = vmax.f32 %v1670, 0.0
      %v1679 = vmax.f32 %v1671, 0.0
      %v1680 = vmax.f32 %v1672, 0.0
      %v1681 = vmax.f32 %v1673, 0.0
      %v1682 = vmax.f32 %v1674, 0.0
      %v1683 = vmax.f32 %v1675, 0.0
      %v1684 = vmax.f32 %v1676, 0.0
      %v1685 = vmin.f32 %v1677, 6.0
      %v1686 = vmin.f32 %v1678, 6.0
      %v1687 = vmin.f32 %v1679, 6.0
      %v1688 = vmin.f32 %v1680, 6.0
      %v1689 = vmin.f32 %v1681, 6.0
      %v1690 = vmin.f32 %v1682, 6.0
      %v1691 = vmin.f32 %v1683, 6.0
      %v1692 = vmin.f32 %v1684, 6.0
      %1693 = vst [vmem:[%s392] sm:$0xff] %v1689
      %1694 = vst [vmem:[%s392 + $0x8] sm:$0xff] %v1690
      %1695 = vst [vmem:[%s392 + $0x10] sm:$0xff] %v1691
      %1696 = vst [vmem:[%s392 + $0x18] sm:$0xff] %v1692
      %1697 = vrot.lane.b32.xlu0 %v1685, 17
      %v1698 = vpop.permute.xlu0 %1697
      %1699 = vrot.lane.b32.xlu0 %v1687, 17
      %v1700 = vpop.permute.xlu0 %1699
      %1701 = vrot.lane.b32.xlu0 %v1686, 17
      %v1702 = vpop.permute.xlu0 %1701
      %1703 = vrot.lane.b32.xlu0 %v1688, 17
      %v1704 = vpop.permute.xlu0 %1703
      %v1705 = vsel %vm536, %v1698, %v1702
      %v1706 = vsel %vm536, %v1700, %v1704
      %v1707 = vsel %vm536, %v1702, %v1698
      %v1708 = vsel %vm536, %v1704, %v1700
      %v1709 = vld [vmem:[%s2] ss:$8 sm:$0x3]
      %v1711 = vlaneseq
      %v1712 = vshrl.u32 %v1711, 7
      %v1713 = vsub.s32 0, %v1712
      %v1714 = vrot.slane %v1709, %v1713
      %v1715 = vlaneseq
      %v1716 = vshrl.u32 %v1715, 7
      %v1717 = vsub.s32 1, %v1716
      %v1718 = vrot.slane %v1709, %v1717
      %v1721 = vmul.f32 %v1707, %v1714
      %v1722 = vmul.f32 %v1705, %v1718
      %v1723 = vmul.f32 %v1708, %v1714
      %v1724 = vmul.f32 %v1706, %v1718
      %v1725 = vld [vmem:[%s7] sm:$0xf]
      %v1726 = vld [vmem:[%s7 + $0x4] sm:$0xf]
      %v1727 = vpack.c.bf16 %v1723, %v1721
      %v1728 = vpack.c.bf16 %v1724, %v1722
      %1729 = vrot.lane.b32.xlu0 %v1685, 16
      %v1730 = vpop.permute.xlu0 %1729
      %1731 = vrot.lane.b32.xlu0 %v1687, 16
      %v1732 = vpop.permute.xlu0 %1731
      %1733 = vrot.lane.b32.xlu0 %v1686, 16
      %v1734 = vpop.permute.xlu0 %1733
      %1735 = vrot.lane.b32.xlu0 %v1688, 16
      %v1736 = vpop.permute.xlu0 %1735
      %v1737 = vsel %vm589, %v1730, %v1734
      %v1738 = vsel %vm589, %v1732, %v1736
      %v1739 = vsel %vm589, %v1734, %v1730
      %v1740 = vsel %vm589, %v1736, %v1732
      %v1741 = vld [vmem:[%s598] ss:$8 sm:$0x3]
      %v1743 = vlaneseq
      %v1744 = vshrl.u32 %v1743, 7
      %v1745 = vsub.s32 0, %v1744
      %v1746 = vrot.slane %v1741, %v1745
      %v1747 = vlaneseq
      %v1748 = vshrl.u32 %v1747, 7
      %v1749 = vsub.s32 1, %v1748
      %v1750 = vrot.slane %v1741, %v1749
      %v1753 = vmul.f32 %v1739, %v1746
      %v1754 = vmul.f32 %v1737, %v1750
      %v1755 = vmul.f32 %v1740, %v1746
      %v1756 = vmul.f32 %v1738, %v1750
      %s1757 = scalar_lea.vmem %s7, 8
      %v1758 = vld [vmem:[%s1757] sm:$0xf]
      %v1759 = vld [vmem:[%s1757 + $0x4] sm:$0xf]
      %v1760 = vpack.c.bf16 %v1755, %v1753
      %v1761 = vpack.c.bf16 %v1756, %v1754
      %v1764 = vunpack.c.l.b16 %v1758
      %v1765 = vunpack.c.l.b16 %v1759
      %v1766 = vpack.c.b16 %v1765, %v1764
      %vm1767 = vcmask 130048
      %v1769 = vsel %vm1767, %v1766, 0
      %1771 = vmatprep.subr.bf16.mxu0 0
      %1772 = vmatpush1.bf16.msra.mxu0 0
      %1773 = vmatprep.subr.bf16.mxu0 0
      %1774 = vmatpush1.bf16.msra.mxu0 0
      %1775 = vmatprep.subr.bf16.mxu0 0
      %1776 = vmatpush1.bf16.msra.mxu0 0
      %1777 = vmatprep.subr.bf16.mxu0 0
      %1778 = vmatpush1.bf16.msra.mxu0 0
      %1779 = vmatprep.subr.bf16.mxu0 0
      %1780 = vmatpush1.bf16.msra.mxu0 0
      %1781 = vmatprep.subr.bf16.mxu0 0
      %1782 = vmatpush1.bf16.msra.mxu0 0
      %1783 = vmatprep.subr.bf16.mxu0 0
      %1784 = vmatpush1.bf16.msra.mxu0 0
      %1785 = vmatprep.subr.bf16.mxu0 %v1761
      %1786 = vmatpush1.bf16.msra.mxu0 %v1760
      %1787 = vmatprep.subr.bf16.mxu0 0
      %1788 = vmatpush2.bf16.msra.mxu0 0
      %1789 = vmatprep.subr.bf16.mxu0 0
      %1790 = vmatpush2.bf16.msra.mxu0 0
      %1791 = vmatprep.subr.bf16.mxu0 0
      %1792 = vmatpush2.bf16.msra.mxu0 0
      %1793 = vmatprep.subr.bf16.mxu0 0
      %1794 = vmatpush2.bf16.msra.mxu0 0
      %1795 = vmatprep.subr.bf16.mxu0 0
      %1796 = vmatpush2.bf16.msra.mxu0 0
      %1797 = vmatprep.subr.bf16.mxu0 0
      %1798 = vmatpush2.bf16.msra.mxu0 0
      %1799 = vmatprep.subr.bf16.mxu0 0
      %1800 = vmatpush2.bf16.msra.mxu0 0
      %1801 = vmatprep.subr.bf16.mxu0 0
      %1802 = vmatpush2.bf16.msra.mxu0 0
      %1803 = vmatprep.mubr.bf16.mxu0 0
      %1804 = vmatmul.mubr.bf16.gmra.mxu0 %v1769
      %v1805 = vpop.f32.mrf.mxu0
      %v1806 = vadd.f32 0.0, %v1805
      %v1807 = vpop.f32.mrf.mxu0
      %v1808 = vadd.f32 0.0, %v1807
      %v1809 = vpop.f32.mrf.mxu0
      %v1810 = vadd.f32 0.0, %v1809
      %v1811 = vpop.f32.mrf.mxu0
      %v1812 = vadd.f32 0.0, %v1811
      %1813 = vdwg.mxu0
      %v1816 = vunpack.c.l.b16 %v1725
      %v1817 = vunpack.c.l.b16 %v1726
      %v1818 = vpack.c.b16 %v1817, %v1816
      %v1820 = vsel %vm1767, %v1818, 0
      %1822 = vmatprep.subr.bf16.mxu0 0
      %1823 = vmatpush1.bf16.msra.mxu0 0
      %1824 = vmatprep.subr.bf16.mxu0 0
      %1825 = vmatpush1.bf16.msra.mxu0 0
      %1826 = vmatprep.subr.bf16.mxu0 0
      %1827 = vmatpush1.bf16.msra.mxu0 0
      %1828 = vmatprep.subr.bf16.mxu0 0
      %1829 = vmatpush1.bf16.msra.mxu0 0
      %1830 = vmatprep.subr.bf16.mxu0 0
      %1831 = vmatpush1.bf16.msra.mxu0 0
      %1832 = vmatprep.subr.bf16.mxu0 0
      %1833 = vmatpush1.bf16.msra.mxu0 0
      %1834 = vmatprep.subr.bf16.mxu0 0
      %1835 = vmatpush1.bf16.msra.mxu0 0
      %1836 = vmatprep.subr.bf16.mxu0 %v1728
      %1837 = vmatpush1.bf16.msra.mxu0 %v1727
      %1838 = vmatprep.subr.bf16.mxu0 0
      %1839 = vmatpush2.bf16.msra.mxu0 0
      %1840 = vmatprep.subr.bf16.mxu0 0
      %1841 = vmatpush2.bf16.msra.mxu0 0
      %1842 = vmatprep.subr.bf16.mxu0 0
      %1843 = vmatpush2.bf16.msra.mxu0 0
      %1844 = vmatprep.subr.bf16.mxu0 0
      %1845 = vmatpush2.bf16.msra.mxu0 0
      %1846 = vmatprep.subr.bf16.mxu0 0
      %1847 = vmatpush2.bf16.msra.mxu0 0
      %1848 = vmatprep.subr.bf16.mxu0 0
      %1849 = vmatpush2.bf16.msra.mxu0 0
      %1850 = vmatprep.subr.bf16.mxu0 0
      %1851 = vmatpush2.bf16.msra.mxu0 0
      %1852 = vmatprep.subr.bf16.mxu0 0
      %1853 = vmatpush2.bf16.msra.mxu0 0
      %1854 = vmatprep.mubr.bf16.mxu0 0
      %1855 = vmatmul.mubr.bf16.gmra.mxu0 %v1820
      %v1856 = vpop.f32.mrf.mxu0
      %v1857 = vadd.f32 %v1806, %v1856
      %v1858 = vpop.f32.mrf.mxu0
      %v1859 = vadd.f32 %v1808, %v1858
      %v1860 = vpop.f32.mrf.mxu0
      %v1861 = vadd.f32 %v1810, %v1860
      %v1862 = vpop.f32.mrf.mxu0
      %v1863 = vadd.f32 %v1812, %v1862
      %1864 = vdwg.mxu0
      %1865 = vrot.lane.b32.xlu0 %v1685, 15
      %v1866 = vpop.permute.xlu0 %1865
      %1867 = vrot.lane.b32.xlu0 %v1687, 15
      %v1868 = vpop.permute.xlu0 %1867
      %1869 = vrot.lane.b32.xlu0 %v1686, 15
      %v1870 = vpop.permute.xlu0 %1869
      %1871 = vrot.lane.b32.xlu0 %v1688, 15
      %v1872 = vpop.permute.xlu0 %1871
      %v1873 = vsel %vm783, %v1866, %v1870
      %v1874 = vsel %vm783, %v1868, %v1872
      %v1875 = vsel %vm783, %v1870, %v1866
      %v1876 = vsel %vm783, %v1872, %v1868
      %v1877 = vld [vmem:[%s792] ss:$8 sm:$0x3]
      %v1879 = vlaneseq
      %v1880 = vshrl.u32 %v1879, 7
      %v1881 = vsub.s32 0, %v1880
      %v1882 = vrot.slane %v1877, %v1881
      %v1883 = vlaneseq
      %v1884 = vshrl.u32 %v1883, 7
      %v1885 = vsub.s32 1, %v1884
      %v1886 = vrot.slane %v1877, %v1885
      %v1889 = vmul.f32 %v1875, %v1882
      %v1890 = vmul.f32 %v1873, %v1886
      %v1891 = vmul.f32 %v1876, %v1882
      %v1892 = vmul.f32 %v1874, %v1886
      %s1893 = scalar_lea.vmem %s7, 16
      %v1894 = vld [vmem:[%s1893] sm:$0xf]
      %v1895 = vld [vmem:[%s1893 + $0x4] sm:$0xf]
      %v1896 = vpack.c.bf16 %v1891, %v1889
      %v1897 = vpack.c.bf16 %v1892, %v1890
      %v1900 = vunpack.c.l.b16 %v1894
      %v1901 = vunpack.c.l.b16 %v1895
      %v1902 = vpack.c.b16 %v1901, %v1900
      %v1904 = vsel %vm1767, %v1902, 0
      %1906 = vmatprep.subr.bf16.mxu0 0
      %1907 = vmatpush1.bf16.msra.mxu0 0
      %1908 = vmatprep.subr.bf16.mxu0 0
      %1909 = vmatpush1.bf16.msra.mxu0 0
      %1910 = vmatprep.subr.bf16.mxu0 0
      %1911 = vmatpush1.bf16.msra.mxu0 0
      %1912 = vmatprep.subr.bf16.mxu0 0
      %1913 = vmatpush1.bf16.msra.mxu0 0
      %1914 = vmatprep.subr.bf16.mxu0 0
      %1915 = vmatpush1.bf16.msra.mxu0 0
      %1916 = vmatprep.subr.bf16.mxu0 0
      %1917 = vmatpush1.bf16.msra.mxu0 0
      %1918 = vmatprep.subr.bf16.mxu0 0
      %1919 = vmatpush1.bf16.msra.mxu0 0
      %1920 = vmatprep.subr.bf16.mxu0 %v1897
      %1921 = vmatpush1.bf16.msra.mxu0 %v1896
      %1922 = vmatprep.subr.bf16.mxu0 0
      %1923 = vmatpush2.bf16.msra.mxu0 0
      %1924 = vmatprep.subr.bf16.mxu0 0
      %1925 = vmatpush2.bf16.msra.mxu0 0
      %1926 = vmatprep.subr.bf16.mxu0 0
      %1927 = vmatpush2.bf16.msra.mxu0 0
      %1928 = vmatprep.subr.bf16.mxu0 0
      %1929 = vmatpush2.bf16.msra.mxu0 0
      %1930 = vmatprep.subr.bf16.mxu0 0
      %1931 = vmatpush2.bf16.msra.mxu0 0
      %1932 = vmatprep.subr.bf16.mxu0 0
      %1933 = vmatpush2.bf16.msra.mxu0 0
      %1934 = vmatprep.subr.bf16.mxu0 0
      %1935 = vmatpush2.bf16.msra.mxu0 0
      %1936 = vmatprep.subr.bf16.mxu0 0
      %1937 = vmatpush2.bf16.msra.mxu0 0
      %1938 = vmatprep.mubr.bf16.mxu0 0
      %1939 = vmatmul.mubr.bf16.gmra.mxu0 %v1904
      %v1940 = vpop.f32.mrf.mxu0
      %v1941 = vadd.f32 0.0, %v1940
      %v1942 = vpop.f32.mrf.mxu0
      %v1943 = vadd.f32 0.0, %v1942
      %v1944 = vpop.f32.mrf.mxu0
      %v1945 = vadd.f32 0.0, %v1944
      %v1946 = vpop.f32.mrf.mxu0
      %v1947 = vadd.f32 0.0, %v1946
      %1948 = vdwg.mxu0
      %v1949 = vadd.f32 %v1857, %v1941
      %v1950 = vadd.f32 %v1859, %v1943
      %v1951 = vadd.f32 %v1861, %v1945
      %v1952 = vadd.f32 %v1863, %v1947
      %1953 = vrot.lane.b32.xlu0 %v1685, 1
      %v1954 = vpop.permute.xlu0 %1953
      %1955 = vrot.lane.b32.xlu0 %v1687, 1
      %v1956 = vpop.permute.xlu0 %1955
      %1957 = vrot.lane.b32.xlu0 %v1686, 1
      %v1958 = vpop.permute.xlu0 %1957
      %1959 = vrot.lane.b32.xlu0 %v1688, 1
      %v1960 = vpop.permute.xlu0 %1959
      %v1961 = vsel %vm915, %v1954, %v1958
      %v1962 = vsel %vm915, %v1956, %v1960
      %v1963 = vsel %vm915, %v1958, %v1954
      %v1964 = vsel %vm915, %v1960, %v1956
      %v1965 = vld [vmem:[%s924] ss:$8 sm:$0x3]
      %v1967 = vlaneseq
      %v1968 = vshrl.u32 %v1967, 7
      %v1969 = vsub.s32 0, %v1968
      %v1970 = vrot.slane %v1965, %v1969
      %v1971 = vlaneseq
      %v1972 = vshrl.u32 %v1971, 7
      %v1973 = vsub.s32 1, %v1972
      %v1974 = vrot.slane %v1965, %v1973
      %v1977 = vmul.f32 %v1963, %v1970
      %v1978 = vmul.f32 %v1961, %v1974
      %v1979 = vmul.f32 %v1964, %v1970
      %v1980 = vmul.f32 %v1962, %v1974
      %s1981 = scalar_lea.vmem %s7, 24
      %v1982 = vld [vmem:[%s1981] sm:$0xf]
      %v1983 = vld [vmem:[%s1981 + $0x4] sm:$0xf]
      %v1984 = vpack.c.bf16 %v1979, %v1977
      %v1985 = vpack.c.bf16 %v1980, %v1978
      %v1988 = vunpack.c.l.b16 %v1982
      %v1989 = vunpack.c.l.b16 %v1983
      %v1990 = vpack.c.b16 %v1989, %v1988
      %v1992 = vsel %vm1767, %v1990, 0
      %1994 = vmatprep.subr.bf16.mxu0 0
      %1995 = vmatpush1.bf16.msra.mxu0 0
      %1996 = vmatprep.subr.bf16.mxu0 0
      %1997 = vmatpush1.bf16.msra.mxu0 0
      %1998 = vmatprep.subr.bf16.mxu0 0
      %1999 = vmatpush1.bf16.msra.mxu0 0
      %2000 = vmatprep.subr.bf16.mxu0 0
      %2001 = vmatpush1.bf16.msra.mxu0 0
      %2002 = vmatprep.subr.bf16.mxu0 0
      %2003 = vmatpush1.bf16.msra.mxu0 0
      %2004 = vmatprep.subr.bf16.mxu0 0
      %2005 = vmatpush1.bf16.msra.mxu0 0
      %2006 = vmatprep.subr.bf16.mxu0 0
      %2007 = vmatpush1.bf16.msra.mxu0 0
      %2008 = vmatprep.subr.bf16.mxu0 %v1985
      %2009 = vmatpush1.bf16.msra.mxu0 %v1984
      %2010 = vmatprep.subr.bf16.mxu0 0
      %2011 = vmatpush2.bf16.msra.mxu0 0
      %2012 = vmatprep.subr.bf16.mxu0 0
      %2013 = vmatpush2.bf16.msra.mxu0 0
      %2014 = vmatprep.subr.bf16.mxu0 0
      %2015 = vmatpush2.bf16.msra.mxu0 0
      %2016 = vmatprep.subr.bf16.mxu0 0
      %2017 = vmatpush2.bf16.msra.mxu0 0
      %2018 = vmatprep.subr.bf16.mxu0 0
      %2019 = vmatpush2.bf16.msra.mxu0 0
      %2020 = vmatprep.subr.bf16.mxu0 0
      %2021 = vmatpush2.bf16.msra.mxu0 0
      %2022 = vmatprep.subr.bf16.mxu0 0
      %2023 = vmatpush2.bf16.msra.mxu0 0
      %2024 = vmatprep.subr.bf16.mxu0 0
      %2025 = vmatpush2.bf16.msra.mxu0 0
      %2026 = vmatprep.mubr.bf16.mxu0 0
      %2027 = vmatmul.mubr.bf16.gmra.mxu0 %v1992
      %v2028 = vpop.f32.mrf.mxu0
      %v2029 = vadd.f32 0.0, %v2028
      %v2030 = vpop.f32.mrf.mxu0
      %v2031 = vadd.f32 0.0, %v2030
      %v2032 = vpop.f32.mrf.mxu0
      %v2033 = vadd.f32 0.0, %v2032
      %v2034 = vpop.f32.mrf.mxu0
      %v2035 = vadd.f32 0.0, %v2034
      %2036 = vdwg.mxu0
      %v2037 = vadd.f32 %v1949, %v2029
      %v2038 = vadd.f32 %v1950, %v2031
      %v2039 = vadd.f32 %v1951, %v2033
      %v2040 = vadd.f32 %v1952, %v2035
      %s2041 = scalar_lea.vmem %s7, 32
      %v2042 = vld [vmem:[%s2041] sm:$0xf]
      %v2043 = vld [vmem:[%s2041 + $0x4] sm:$0xf]
      %v2044 = vpack.c.bf16 %v1687, %v1685
      %v2045 = vpack.c.bf16 %v1688, %v1686
      %v2048 = vunpack.c.l.b16 %v2042
      %v2049 = vunpack.c.l.b16 %v2043
      %v2050 = vpack.c.b16 %v2049, %v2048
      %v2052 = vsel %vm1767, %v2050, 0
      %2054 = vmatprep.subr.bf16.mxu0 0
      %2055 = vmatpush1.bf16.msra.mxu0 0
      %2056 = vmatprep.subr.bf16.mxu0 0
      %2057 = vmatpush1.bf16.msra.mxu0 0
      %2058 = vmatprep.subr.bf16.mxu0 0
      %2059 = vmatpush1.bf16.msra.mxu0 0
      %2060 = vmatprep.subr.bf16.mxu0 0
      %2061 = vmatpush1.bf16.msra.mxu0 0
      %2062 = vmatprep.subr.bf16.mxu0 0
      %2063 = vmatpush1.bf16.msra.mxu0 0
      %2064 = vmatprep.subr.bf16.mxu0 0
      %2065 = vmatpush1.bf16.msra.mxu0 0
      %2066 = vmatprep.subr.bf16.mxu0 0
      %2067 = vmatpush1.bf16.msra.mxu0 0
      %2068 = vmatprep.subr.bf16.mxu0 %v2045
      %2069 = vmatpush1.bf16.msra.mxu0 %v2044
      %2070 = vmatprep.subr.bf16.mxu0 0
      %2071 = vmatpush2.bf16.msra.mxu0 0
      %2072 = vmatprep.subr.bf16.mxu0 0
      %2073 = vmatpush2.bf16.msra.mxu0 0
      %2074 = vmatprep.subr.bf16.mxu0 0
      %2075 = vmatpush2.bf16.msra.mxu0 0
      %2076 = vmatprep.subr.bf16.mxu0 0
      %2077 = vmatpush2.bf16.msra.mxu0 0
      %2078 = vmatprep.subr.bf16.mxu0 0
      %2079 = vmatpush2.bf16.msra.mxu0 0
      %2080 = vmatprep.subr.bf16.mxu0 0
      %2081 = vmatpush2.bf16.msra.mxu0 0
      %2082 = vmatprep.subr.bf16.mxu0 0
      %2083 = vmatpush2.bf16.msra.mxu0 0
      %2084 = vmatprep.subr.bf16.mxu0 0
      %2085 = vmatpush2.bf16.msra.mxu0 0
      %2086 = vmatprep.mubr.bf16.mxu0 0
      %2087 = vmatmul.mubr.bf16.gmra.mxu0 %v2052
      %v2088 = vpop.f32.mrf.mxu0
      %v2089 = vadd.f32 0.0, %v2088
      %v2090 = vpop.f32.mrf.mxu0
      %v2091 = vadd.f32 0.0, %v2090
      %v2092 = vpop.f32.mrf.mxu0
      %v2093 = vadd.f32 0.0, %v2092
      %v2094 = vpop.f32.mrf.mxu0
      %v2095 = vadd.f32 0.0, %v2094
      %2096 = vdwg.mxu0
      %v2097 = vadd.f32 %v2037, %v2089
      %v2098 = vadd.f32 %v2038, %v2091
      %v2099 = vadd.f32 %v2039, %v2093
      %v2100 = vadd.f32 %v2040, %v2095
      %2101 = vrot.lane.b32.xlu0 %v1685, 127
      %v2102 = vpop.permute.xlu0 %2101
      %2103 = vrot.lane.b32.xlu0 %v1687, 127
      %v2104 = vpop.permute.xlu0 %2103
      %2105 = vrot.lane.b32.xlu0 %v1686, 127
      %v2106 = vpop.permute.xlu0 %2105
      %2107 = vrot.lane.b32.xlu0 %v1688, 127
      %v2108 = vpop.permute.xlu0 %2107
      %v2109 = vsel %vm1133, %v2102, %v2106
      %v2110 = vsel %vm1133, %v2104, %v2108
      %v2111 = vsel %vm1133, %v2106, %v2102
      %v2112 = vsel %vm1133, %v2108, %v2104
      %v2113 = vld [vmem:[%s1142] ss:$8 sm:$0x3]
      %v2115 = vlaneseq
      %v2116 = vshrl.u32 %v2115, 7
      %v2117 = vsub.s32 0, %v2116
      %v2118 = vrot.slane %v2113, %v2117
      %v2119 = vlaneseq
      %v2120 = vshrl.u32 %v2119, 7
      %v2121 = vsub.s32 1, %v2120
      %v2122 = vrot.slane %v2113, %v2121
      %v2125 = vmul.f32 %v2109, %v2118
      %v2126 = vmul.f32 %v2111, %v2122
      %v2127 = vmul.f32 %v2110, %v2118
      %v2128 = vmul.f32 %v2112, %v2122
      %s2129 = scalar_lea.vmem %s7, 40
      %v2130 = vld [vmem:[%s2129] sm:$0xf]
      %v2131 = vld [vmem:[%s2129 + $0x4] sm:$0xf]
      %v2132 = vpack.c.bf16 %v2127, %v2125
      %v2133 = vpack.c.bf16 %v2128, %v2126
      %v2136 = vunpack.c.l.b16 %v2130
      %v2137 = vunpack.c.l.b16 %v2131
      %v2138 = vpack.c.b16 %v2137, %v2136
      %v2140 = vsel %vm1767, %v2138, 0
      %2142 = vmatprep.subr.bf16.mxu0 0
      %2143 = vmatpush1.bf16.msra.mxu0 0
      %2144 = vmatprep.subr.bf16.mxu0 0
      %2145 = vmatpush1.bf16.msra.mxu0 0
      %2146 = vmatprep.subr.bf16.mxu0 0
      %2147 = vmatpush1.bf16.msra.mxu0 0
      %2148 = vmatprep.subr.bf16.mxu0 0
      %2149 = vmatpush1.bf16.msra.mxu0 0
      %2150 = vmatprep.subr.bf16.mxu0 0
      %2151 = vmatpush1.bf16.msra.mxu0 0
      %2152 = vmatprep.subr.bf16.mxu0 0
      %2153 = vmatpush1.bf16.msra.mxu0 0
      %2154 = vmatprep.subr.bf16.mxu0 0
      %2155 = vmatpush1.bf16.msra.mxu0 0
      %2156 = vmatprep.subr.bf16.mxu0 %v2133
      %2157 = vmatpush1.bf16.msra.mxu0 %v2132
      %2158 = vmatprep.subr.bf16.mxu0 0
      %2159 = vmatpush2.bf16.msra.mxu0 0
      %2160 = vmatprep.subr.bf16.mxu0 0
      %2161 = vmatpush2.bf16.msra.mxu0 0
      %2162 = vmatprep.subr.bf16.mxu0 0
      %2163 = vmatpush2.bf16.msra.mxu0 0
      %2164 = vmatprep.subr.bf16.mxu0 0
      %2165 = vmatpush2.bf16.msra.mxu0 0
      %2166 = vmatprep.subr.bf16.mxu0 0
      %2167 = vmatpush2.bf16.msra.mxu0 0
      %2168 = vmatprep.subr.bf16.mxu0 0
      %2169 = vmatpush2.bf16.msra.mxu0 0
      %2170 = vmatprep.subr.bf16.mxu0 0
      %2171 = vmatpush2.bf16.msra.mxu0 0
      %2172 = vmatprep.subr.bf16.mxu0 0
      %2173 = vmatpush2.bf16.msra.mxu0 0
      %2174 = vmatprep.mubr.bf16.mxu0 0
      %2175 = vmatmul.mubr.bf16.gmra.mxu0 %v2140
      %v2176 = vpop.f32.mrf.mxu0
      %v2177 = vadd.f32 0.0, %v2176
      %v2178 = vpop.f32.mrf.mxu0
      %v2179 = vadd.f32 0.0, %v2178
      %v2180 = vpop.f32.mrf.mxu0
      %v2181 = vadd.f32 0.0, %v2180
      %v2182 = vpop.f32.mrf.mxu0
      %v2183 = vadd.f32 0.0, %v2182
      %2184 = vdwg.mxu0
      %v2185 = vadd.f32 %v2097, %v2177
      %v2186 = vadd.f32 %v2098, %v2179
      %v2187 = vadd.f32 %v2099, %v2181
      %v2188 = vadd.f32 %v2100, %v2183
      %2189 = vrot.lane.b32.xlu0 %v1685, 113
      %v2190 = vpop.permute.xlu0 %2189
      %2191 = vrot.lane.b32.xlu0 %v1687, 113
      %v2192 = vpop.permute.xlu0 %2191
      %2193 = vrot.lane.b32.xlu0 %v1686, 113
      %v2194 = vpop.permute.xlu0 %2193
      %2195 = vrot.lane.b32.xlu0 %v1688, 113
      %v2196 = vpop.permute.xlu0 %2195
      %v2197 = vsel %vm1265, %v2190, %v2194
      %v2198 = vsel %vm1265, %v2192, %v2196
      %v2199 = vsel %vm1265, %v2194, %v2190
      %v2200 = vsel %vm1265, %v2196, %v2192
      %v2201 = vld [vmem:[%s1274] ss:$8 sm:$0x3]
      %v2203 = vlaneseq
      %v2204 = vshrl.u32 %v2203, 7
      %v2205 = vsub.s32 0, %v2204
      %v2206 = vrot.slane %v2201, %v2205
      %v2207 = vlaneseq
      %v2208 = vshrl.u32 %v2207, 7
      %v2209 = vsub.s32 1, %v2208
      %v2210 = vrot.slane %v2201, %v2209
      %v2213 = vmul.f32 %v2197, %v2206
      %v2214 = vmul.f32 %v2199, %v2210
      %v2215 = vmul.f32 %v2198, %v2206
      %v2216 = vmul.f32 %v2200, %v2210
      %s2217 = scalar_lea.vmem %s7, 48
      %v2218 = vld [vmem:[%s2217] sm:$0xf]
      %v2219 = vld [vmem:[%s2217 + $0x4] sm:$0xf]
      %v2220 = vpack.c.bf16 %v2215, %v2213
      %v2221 = vpack.c.bf16 %v2216, %v2214
      %v2224 = vunpack.c.l.b16 %v2218
      %v2225 = vunpack.c.l.b16 %v2219
      %v2226 = vpack.c.b16 %v2225, %v2224
      %v2228 = vsel %vm1767, %v2226, 0
      %2230 = vmatprep.subr.bf16.mxu0 0
      %2231 = vmatpush1.bf16.msra.mxu0 0
      %2232 = vmatprep.subr.bf16.mxu0 0
      %2233 = vmatpush1.bf16.msra.mxu0 0
      %2234 = vmatprep.subr.bf16.mxu0 0
      %2235 = vmatpush1.bf16.msra.mxu0 0
      %2236 = vmatprep.subr.bf16.mxu0 0
      %2237 = vmatpush1.bf16.msra.mxu0 0
      %2238 = vmatprep.subr.bf16.mxu0 0
      %2239 = vmatpush1.bf16.msra.mxu0 0
      %2240 = vmatprep.subr.bf16.mxu0 0
      %2241 = vmatpush1.bf16.msra.mxu0 0
      %2242 = vmatprep.subr.bf16.mxu0 0
      %2243 = vmatpush1.bf16.msra.mxu0 0
      %2244 = vmatprep.subr.bf16.mxu0 %v2221
      %2245 = vmatpush1.bf16.msra.mxu0 %v2220
      %2246 = vmatprep.subr.bf16.mxu0 0
      %2247 = vmatpush2.bf16.msra.mxu0 0
      %2248 = vmatprep.subr.bf16.mxu0 0
      %2249 = vmatpush2.bf16.msra.mxu0 0
      %2250 = vmatprep.subr.bf16.mxu0 0
      %2251 = vmatpush2.bf16.msra.mxu0 0
      %2252 = vmatprep.subr.bf16.mxu0 0
      %2253 = vmatpush2.bf16.msra.mxu0 0
      %2254 = vmatprep.subr.bf16.mxu0 0
      %2255 = vmatpush2.bf16.msra.mxu0 0
      %2256 = vmatprep.subr.bf16.mxu0 0
      %2257 = vmatpush2.bf16.msra.mxu0 0
      %2258 = vmatprep.subr.bf16.mxu0 0
      %2259 = vmatpush2.bf16.msra.mxu0 0
      %2260 = vmatprep.subr.bf16.mxu0 0
      %2261 = vmatpush2.bf16.msra.mxu0 0
      %2262 = vmatprep.mubr.bf16.mxu0 0
      %2263 = vmatmul.mubr.bf16.gmra.mxu0 %v2228
      %v2264 = vpop.f32.mrf.mxu0
      %v2265 = vadd.f32 0.0, %v2264
      %v2266 = vpop.f32.mrf.mxu0
      %v2267 = vadd.f32 0.0, %v2266
      %v2268 = vpop.f32.mrf.mxu0
      %v2269 = vadd.f32 0.0, %v2268
      %v2270 = vpop.f32.mrf.mxu0
      %v2271 = vadd.f32 0.0, %v2270
      %2272 = vdwg.mxu0
      %v2273 = vadd.f32 %v2185, %v2265
      %v2274 = vadd.f32 %v2186, %v2267
      %v2275 = vadd.f32 %v2187, %v2269
      %v2276 = vadd.f32 %v2188, %v2271
      %2277 = vrot.lane.b32.xlu0 %v1685, 112
      %v2278 = vpop.permute.xlu0 %2277
      %2279 = vrot.lane.b32.xlu0 %v1687, 112
      %v2280 = vpop.permute.xlu0 %2279
      %2281 = vrot.lane.b32.xlu0 %v1686, 112
      %v2282 = vpop.permute.xlu0 %2281
      %2283 = vrot.lane.b32.xlu0 %v1688, 112
      %v2284 = vpop.permute.xlu0 %2283
      %v2285 = vsel %vm1397, %v2278, %v2282
      %v2286 = vsel %vm1397, %v2280, %v2284
      %v2287 = vsel %vm1397, %v2282, %v2278
      %v2288 = vsel %vm1397, %v2284, %v2280
      %v2289 = vld [vmem:[%s1406] ss:$8 sm:$0x3]
      %v2291 = vlaneseq
      %v2292 = vshrl.u32 %v2291, 7
      %v2293 = vsub.s32 0, %v2292
      %v2294 = vrot.slane %v2289, %v2293
      %v2295 = vlaneseq
      %v2296 = vshrl.u32 %v2295, 7
      %v2297 = vsub.s32 1, %v2296
      %v2298 = vrot.slane %v2289, %v2297
      %v2301 = vmul.f32 %v2285, %v2294
      %v2302 = vmul.f32 %v2287, %v2298
      %v2303 = vmul.f32 %v2286, %v2294
      %v2304 = vmul.f32 %v2288, %v2298
      %s2305 = scalar_lea.vmem %s7, 56
      %v2306 = vld [vmem:[%s2305] sm:$0xf]
      %v2307 = vld [vmem:[%s2305 + $0x4] sm:$0xf]
      %v2308 = vpack.c.bf16 %v2303, %v2301
      %v2309 = vpack.c.bf16 %v2304, %v2302
      %v2312 = vunpack.c.l.b16 %v2306
      %v2313 = vunpack.c.l.b16 %v2307
      %v2314 = vpack.c.b16 %v2313, %v2312
      %v2316 = vsel %vm1767, %v2314, 0
      %2318 = vmatprep.subr.bf16.mxu0 0
      %2319 = vmatpush1.bf16.msra.mxu0 0
      %2320 = vmatprep.subr.bf16.mxu0 0
      %2321 = vmatpush1.bf16.msra.mxu0 0
      %2322 = vmatprep.subr.bf16.mxu0 0
      %2323 = vmatpush1.bf16.msra.mxu0 0
      %2324 = vmatprep.subr.bf16.mxu0 0
      %2325 = vmatpush1.bf16.msra.mxu0 0
      %2326 = vmatprep.subr.bf16.mxu0 0
      %2327 = vmatpush1.bf16.msra.mxu0 0
      %2328 = vmatprep.subr.bf16.mxu0 0
      %2329 = vmatpush1.bf16.msra.mxu0 0
      %2330 = vmatprep.subr.bf16.mxu0 0
      %2331 = vmatpush1.bf16.msra.mxu0 0
      %2332 = vmatprep.subr.bf16.mxu0 %v2309
      %2333 = vmatpush1.bf16.msra.mxu0 %v2308
      %2334 = vmatprep.subr.bf16.mxu0 0
      %2335 = vmatpush2.bf16.msra.mxu0 0
      %2336 = vmatprep.subr.bf16.mxu0 0
      %2337 = vmatpush2.bf16.msra.mxu0 0
      %2338 = vmatprep.subr.bf16.mxu0 0
      %2339 = vmatpush2.bf16.msra.mxu0 0
      %2340 = vmatprep.subr.bf16.mxu0 0
      %2341 = vmatpush2.bf16.msra.mxu0 0
      %2342 = vmatprep.subr.bf16.mxu0 0
      %2343 = vmatpush2.bf16.msra.mxu0 0
      %2344 = vmatprep.subr.bf16.mxu0 0
      %2345 = vmatpush2.bf16.msra.mxu0 0
      %2346 = vmatprep.subr.bf16.mxu0 0
      %2347 = vmatpush2.bf16.msra.mxu0 0
      %2348 = vmatprep.subr.bf16.mxu0 0
      %2349 = vmatpush2.bf16.msra.mxu0 0
      %2350 = vmatprep.mubr.bf16.mxu0 0
      %2351 = vmatmul.mubr.bf16.gmra.mxu0 %v2316
      %v2352 = vpop.f32.mrf.mxu0
      %v2353 = vadd.f32 0.0, %v2352
      %v2354 = vpop.f32.mrf.mxu0
      %v2355 = vadd.f32 0.0, %v2354
      %v2356 = vpop.f32.mrf.mxu0
      %v2357 = vadd.f32 0.0, %v2356
      %v2358 = vpop.f32.mrf.mxu0
      %v2359 = vadd.f32 0.0, %v2358
      %2360 = vdwg.mxu0
      %v2361 = vadd.f32 %v2273, %v2353
      %v2362 = vadd.f32 %v2274, %v2355
      %v2363 = vadd.f32 %v2275, %v2357
      %v2364 = vadd.f32 %v2276, %v2359
      %2365 = vrot.lane.b32.xlu0 %v1685, 111
      %v2366 = vpop.permute.xlu0 %2365
      %2367 = vrot.lane.b32.xlu0 %v1687, 111
      %v2368 = vpop.permute.xlu0 %2367
      %2369 = vrot.lane.b32.xlu0 %v1686, 111
      %v2370 = vpop.permute.xlu0 %2369
      %2371 = vrot.lane.b32.xlu0 %v1688, 111
      %v2372 = vpop.permute.xlu0 %2371
      %v2373 = vsel %vm1529, %v2366, %v2370
      %v2374 = vsel %vm1529, %v2368, %v2372
      %v2375 = vsel %vm1529, %v2370, %v2366
      %v2376 = vsel %vm1529, %v2372, %v2368
      %v2377 = vld [vmem:[%s1538] ss:$8 sm:$0x3]
      %v2379 = vlaneseq
      %v2380 = vshrl.u32 %v2379, 7
      %v2381 = vsub.s32 0, %v2380
      %v2382 = vrot.slane %v2377, %v2381
      %v2383 = vlaneseq
      %v2384 = vshrl.u32 %v2383, 7
      %v2385 = vsub.s32 1, %v2384
      %v2386 = vrot.slane %v2377, %v2385
      %v2389 = vmul.f32 %v2373, %v2382
      %v2390 = vmul.f32 %v2375, %v2386
      %v2391 = vmul.f32 %v2374, %v2382
      %v2392 = vmul.f32 %v2376, %v2386
      %s2393 = scalar_lea.vmem %s7, 64
      %v2394 = vld [vmem:[%s2393] sm:$0xf]
      %v2395 = vld [vmem:[%s2393 + $0x4] sm:$0xf]
      %v2396 = vpack.c.bf16 %v2391, %v2389
      %v2397 = vpack.c.bf16 %v2392, %v2390
      %v2400 = vunpack.c.l.b16 %v2394
      %v2401 = vunpack.c.l.b16 %v2395
      %v2402 = vpack.c.b16 %v2401, %v2400
      %v2404 = vsel %vm1767, %v2402, 0
      %2406 = vmatprep.subr.bf16.mxu0 0
      %2407 = vmatpush1.bf16.msra.mxu0 0
      %2408 = vmatprep.subr.bf16.mxu0 0
      %2409 = vmatpush1.bf16.msra.mxu0 0
      %2410 = vmatprep.subr.bf16.mxu0 0
      %2411 = vmatpush1.bf16.msra.mxu0 0
      %2412 = vmatprep.subr.bf16.mxu0 0
      %2413 = vmatpush1.bf16.msra.mxu0 0
      %2414 = vmatprep.subr.bf16.mxu0 0
      %2415 = vmatpush1.bf16.msra.mxu0 0
      %2416 = vmatprep.subr.bf16.mxu0 0
      %2417 = vmatpush1.bf16.msra.mxu0 0
      %2418 = vmatprep.subr.bf16.mxu0 0
      %2419 = vmatpush1.bf16.msra.mxu0 0
      %2420 = vmatprep.subr.bf16.mxu0 %v2397
      %2421 = vmatpush1.bf16.msra.mxu0 %v2396
      %2422 = vmatprep.subr.bf16.mxu0 0
      %2423 = vmatpush2.bf16.msra.mxu0 0
      %2424 = vmatprep.subr.bf16.mxu0 0
      %2425 = vmatpush2.bf16.msra.mxu0 0
      %2426 = vmatprep.subr.bf16.mxu0 0
      %2427 = vmatpush2.bf16.msra.mxu0 0
      %2428 = vmatprep.subr.bf16.mxu0 0
      %2429 = vmatpush2.bf16.msra.mxu0 0
      %2430 = vmatprep.subr.bf16.mxu0 0
      %2431 = vmatpush2.bf16.msra.mxu0 0
      %2432 = vmatprep.subr.bf16.mxu0 0
      %2433 = vmatpush2.bf16.msra.mxu0 0
      %2434 = vmatprep.subr.bf16.mxu0 0
      %2435 = vmatpush2.bf16.msra.mxu0 0
      %2436 = vmatprep.subr.bf16.mxu0 0
      %2437 = vmatpush2.bf16.msra.mxu0 0
      %2438 = vmatprep.mubr.bf16.mxu0 0
      %2439 = vmatmul.mubr.bf16.gmra.mxu0 %v2404
      %v2440 = vpop.f32.mrf.mxu0
      %v2441 = vadd.f32 0.0, %v2440
      %v2442 = vpop.f32.mrf.mxu0
      %v2443 = vadd.f32 0.0, %v2442
      %v2444 = vpop.f32.mrf.mxu0
      %v2445 = vadd.f32 0.0, %v2444
      %v2446 = vpop.f32.mrf.mxu0
      %v2447 = vadd.f32 0.0, %v2446
      %2448 = vdwg.mxu0
      %v2449 = vadd.f32 %v2361, %v2441
      %v2450 = vadd.f32 %v2362, %v2443
      %v2451 = vadd.f32 %v2363, %v2445
      %v2452 = vadd.f32 %v2364, %v2447
      %v2453 = vld [vmem:[%s8] sm:$0xff]
      %v2454 = vld [vmem:[%s8 + $0x8] sm:$0xff]
      %2456 = vset.pattern.permute.xlu0 0
      %2457 = vperm.xlu0 %2456, %v2453
      %v2458 = vpop.permute.xlu0 %2457
      %2461 = vset.pattern.permute.xlu0 0
      %2462 = vperm.xlu0 %2461, %v2454
      %v2463 = vpop.permute.xlu0 %2462
      %v2465 = vadd.f32 %v2449, %v2458
      %v2466 = vadd.f32 %v2450, %v2458
      %v2467 = vadd.f32 %v2451, %v2463
      %v2468 = vadd.f32 %v2452, %v2463
      %v2469 = vmax.f32 %v2465, 0.0
      %v2470 = vmax.f32 %v2466, 0.0
      %v2471 = vmax.f32 %v2467, 0.0
      %v2472 = vmax.f32 %v2468, 0.0
      %v2473 = vmin.f32 %v2469, 6.0
      %v2474 = vmin.f32 %v2470, 6.0
      %v2475 = vmin.f32 %v2471, 6.0
      %v2476 = vmin.f32 %v2472, 6.0
      %2477 = vst [vmem:[%s387] sm:$0xff] %v2473
      %2478 = vst [vmem:[%s387 + $0x8] sm:$0xff] %v2474
      %2479 = vst [vmem:[%s387 + $0x10] sm:$0xff] %v2475
      %2480 = vst [vmem:[%s387 + $0x18] sm:$0xff] %v2476
      %p2481 = scmp.lt.s32.totalorder %s22, 1
      %s2482 = scalar_select %p2481, %s22, 1
      %s2483 = smul.addr %s2482, 4
      %s2484 = smul.addr %s2483, 8
      %s2485 = scalar_lea.vmem %s9, %s2484
      %p2486 = scmp.lt.s32.totalorder %s22, 1
      %s2487 = scalar_select %p2486, %s22, 1
      %s2488 = smul.addr %s2487, 4
      %s2489 = smul.addr %s2488, 8
      %s2490 = scalar_lea.vmem %s10, %s2489
      // Predicated region
      $region57: #{cm_forward.1} parent=55 // pred_check
        %p2491 = pneg %p239
      $region58: #{cm_forward.1} parent=55 // pred_check_branch
        %2493 = sbr.rel (%p2491) target = $region60
      $region59: #{cm_forward.1} parent=55 // pred_region
        _
      $region60: #{cm_forward.1} parent=55 // pred_fallthru
        _
      // Predicated region
      $region61: #{cm_forward.1} parent=55 // pred_check
        %p2494 = pneg %p265
      $region62: #{cm_forward.1} parent=55 // pred_check_branch
        %2496 = sbr.rel (%p2494) target = $region64
      $region63: #{cm_forward.1} parent=55 // pred_region
        _
      $region64: #{cm_forward.1} parent=55 // pred_fallthru
        _
    $region56: #{cm_forward.1} parent=5 // pred_fallthru
      _
    %p2497 = scmp.le.s32.totalorder 2, %s17
    // Predicated region
    $region65: #{cm_forward.1} parent=5 // pred_check
      %p2498 = pneg %p2497
    $region66: #{cm_forward.1} parent=5 // pred_check_branch
      %2500 = sbr.rel (%p2498) target = $region68
    $region67: #{cm_forward.1} parent=5 // pred_region
      %s2501 = ssub.s32 %s17, 2
      // Predicated region
      $region69: #{cm_forward.1} parent=67 // pred_check
        %p2502 = pneg %p245
      $region70: #{cm_forward.1} parent=67 // pred_check_branch
        %2504 = sbr.rel (%p2502) target = $region72
      $region71: #{cm_forward.1} parent=67 // pred_region
        %p2505 = scmp.lt.s32.totalorder %s23, 1
        %s2506 = scalar_select %p2505, %s23, 1
        %s2507 = smul.addr %s2506, 4
        %s2508 = smul.addr %s2507, 8
        %s2509 = scalar_lea.vmem %s9, %s2508
      $region72: #{cm_forward.1} parent=67 // pred_fallthru
        _
      // Predicated region
      $region73: #{cm_forward.1} parent=67 // pred_check
        %p2510 = pneg %p271
      $region74: #{cm_forward.1} parent=67 // pred_check_branch
        %2512 = sbr.rel (%p2510) target = $region76
      $region75: #{cm_forward.1} parent=67 // pred_region
        %p2513 = scmp.lt.s32.totalorder %s23, 1
        %s2514 = scalar_select %p2513, %s23, 1
        %s2515 = smul.addr %s2514, 4
        %s2516 = smul.addr %s2515, 8
        %s2517 = scalar_lea.vmem %s10, %s2516
      $region76: #{cm_forward.1} parent=67 // pred_fallthru
        _
    $region68: #{cm_forward.1} parent=5 // pred_fallthru
      _
  $region6: #{cm_forward.1} parent=0 // loop_footer
    %s21 = sadd.s32 1, %s17
  $region7: #{cm_forward.1} parent=0 // loop_footer_branch
    %16 = sbr.rel target = $region3
  $region8: #{cm_forward.1} parent=0 // loop_exit
    _

</llo_original>
